<compile_context>
chip_gen: v6e
topology: v6e:2x2x1
jax: 0.10.0
libtpu: 0.0.40
codegen_flags: <defaults>
</compile_context>

<pallas_src>
import numpy as np

import jax
import jax.numpy as jnp
from jax.experimental import pallas as pl
from jax.experimental.pallas import tpu as pltpu

_VMEM = pl.BlockSpec(memory_space=pltpu.MemorySpace.VMEM)

# Static problem geometry implied by fc1 = Linear(64*3*1, 128):
# x (1,6,18,10) -> conv1 (32,16,8) -> pool (32,8,4)
#               -> conv2 (64,6,2)  -> pool (64,3,1) -> flatten 192
_H, _W, _CIN = 18, 10, 6
_H1, _W1 = 16, 8          # conv1 output -> 128 positions
_HP1, _WP1 = 8, 4         # pool1 output -> 32 positions
_H2, _W2 = 6, 2           # conv2 output -> 12 positions
_HP2 = 3                  # pool2 output -> 3 positions

# ------------------- slab row offsets (all multiples of 8) ------------------ #
_OFF_P1 = 0      # pool1 corner selector      (128, 128)
_OFF_G2 = 128    # conv2 tap selector         (32, 108)
_OFF_Q2 = 160    # pool2 corner selector      (12, 32)
_OFF_W1 = 176    # conv1 weights + bias col   (32, 80)
_OFF_FC1 = 208   # fc1 per-h packs            (192, 128)
_OFF_FB1 = 400   # fc1 bias                   (1, 128)
_OFF_FC2 = 408   # fc2 weight^T               (128, 64)
_OFF_FB2 = 536   # fc2 bias                   (1, 64)
_OFF_FC3 = 544   # fc3 weight^T               (64, 32)
_OFF_FB3 = 608   # fc3 bias                   (1, 32)
_OFF_W4 = 616    # fc4 weight row             (1, 32)
_OFF_FB4 = 624   # fc4 bias                   (1, 1)
_SLAB_ROWS = 632


# --------------------- constant 0/1 selection matrices --------------------- #

def _selection_constants():
    # conv1 tap gather, lane-concatenated over taps: (180, 9*128)
    # column t*128 + (h*8+w) selects input position (h+di)*10 + (w+dj)
    g1 = np.zeros((_H * _W, 9 * _H1 * _W1), np.float32)
    for di in range(3):
        for dj in range(3):
            t = di * 3 + dj
            for h in range(_H1):
                for w in range(_W1):
                    g1[(h + di) * _W + (w + dj), t * 128 + h * _W1 + w] = 1.0

    # pool1 corner gather, lane-concatenated over corners: (128, 4*32)
    p1 = np.zeros((_H1 * _W1, 4 * _HP1 * _WP1), np.float32)
    for a in range(2):
        for b in range(2):
            k = a * 2 + b
            for hp in range(_HP1):
                for wp in range(_WP1):
                    p1[(2 * hp + a) * _W1 + (2 * wp + b),
                       k * 32 + hp * _WP1 + wp] = 1.0

    # conv2 tap gather, lane-concatenated over taps: (32, 9*12)
    g2 = np.zeros((_HP1 * _WP1, 9 * _H2 * _W2), np.float32)
    for di in range(3):
        for dj in range(3):
            t = di * 3 + dj
            for h2 in range(_H2):
                for w2 in range(_W2):
                    g2[(h2 + di) * _WP1 + (w2 + dj), t * 12 + h2 * _W2 + w2] = 1.0

    # pool2 corner gather, lane-concatenated over corners: (12, 4*8)
    q2 = np.zeros((_H2 * _W2, 4 * 8), np.float32)
    for a in range(2):
        for b in range(2):
            k = a * 2 + b
            for h3 in range(_HP2):
                q2[(2 * h3 + a) * _W2 + b, k * 8 + h3] = 1.0

    return g1, p1, g2, q2


# ------------------------------ fused kernel ------------------------------- #

def _fused_forward_kernel(x_ref, g1_ref, w2_ref, slab_ref, o_ref, t1_ref, t2_ref):
    f32 = jnp.float32

    # ---- conv1 stage 1: ONE gather dot against the lane-concatenated selector.
    x_bf = x_ref[...].astype(jnp.bfloat16)                     # (6, 180)
    s1 = jnp.dot(x_bf, g1_ref[...], preferred_element_type=f32)  # (6, 1152)

    # Stack the 9 taps into an (80,128) scratch (8-row blocks, + ones row 72
    # that carries the conv1 bias).  Zero-init kills stale-VMEM NaN risk.
    t1_ref[...] = jnp.zeros_like(t1_ref)
    for t in range(9):
        t1_ref[t * 8:t * 8 + 6, :] = s1[:, t * 128:(t + 1) * 128]
    t1_ref[72:73, :] = jnp.ones((1, 128), f32)

    # ---- conv1 stage 2 + bias + ReLU: ONE dot.
    w1aug = slab_ref[_OFF_W1:_OFF_W1 + 32, 0:80]               # (32, 80)
    a1 = jnp.maximum(
        jnp.dot(w1aug, t1_ref[...], preferred_element_type=f32), 0.0)  # (32, 128)

    # ---- pool1: ONE corner-gather dot, then max over 4 static 32-lane slices.
    p1 = slab_ref[_OFF_P1:_OFF_P1 + 128, :]                    # (128, 128)
    c = jnp.dot(a1, p1, preferred_element_type=f32)            # (32, 128)
    pool1 = jnp.maximum(jnp.maximum(c[:, 0:32], c[:, 32:64]),
                        jnp.maximum(c[:, 64:96], c[:, 96:128]))  # (32, 32)

    # ---- conv2 stage 1: ONE gather dot (12 output positions per tap).
    g2 = slab_ref[_OFF_G2:_OFF_G2 + 32, 0:108]                 # (32, 108)
    s2 = jnp.dot(pool1, g2, preferred_element_type=f32)        # (32, 108)

    t2_ref[...] = jnp.zeros_like(t2_ref)
    for t in range(9):
        t2_ref[t * 32:(t + 1) * 32, :] = s2[:, t * 12:(t + 1) * 12]
    t2_ref[288:289, :] = jnp.ones((1, 12), f32)                # bias row

    # ---- conv2 stage 2 + bias + ReLU: ONE dot.
    a2 = jnp.maximum(
        jnp.dot(w2_ref[...], t2_ref[...], preferred_element_type=f32), 0.0)  # (64, 12)

    # ---- pool2: ONE corner-gather dot, max over 4 static 8-lane slices.
    q2 = slab_ref[_OFF_Q2:_OFF_Q2 + 12, 0:32]                  # (12, 32)
    d = jnp.dot(a2, q2, preferred_element_type=f32)            # (64, 32)
    pool2 = jnp.maximum(jnp.maximum(d[:, 0:8], d[:, 8:16]),
                        jnp.maximum(d[:, 16:24], d[:, 24:32]))   # (64, 8)

    # ---- fc1 over the NCHW .view(-1) flatten (order c*3+h baked into the
    # per-h weight packs): broadcast-mul + sublane reduce (idle VPU/XLU slots).
    h1 = slab_ref[_OFF_FB1:_OFF_FB1 + 1, :]                    # (1, 128)
    for h in range(3):
        fc1_h = slab_ref[_OFF_FC1 + 64 * h:_OFF_FC1 + 64 * (h + 1), :]  # (64, 128)
        h1 = h1 + jnp.sum(pool2[:, h:h + 1] * fc1_h, axis=0, keepdims=True)
    h1 = jnp.maximum(h1, 0.0)

    # ---- fc2 + ReLU; nn.Dropout(0.2) is identity in eval/inference mode.
    # TODO(synk): training-mode dropout (pltpu.prng_* masking) not implemented.
    fc2t = slab_ref[_OFF_FC2:_OFF_FC2 + 128, 0:64]             # (128, 64)
    h2 = jnp.maximum(
        jnp.dot(h1, fc2t, preferred_element_type=f32)
        + slab_ref[_OFF_FB2:_OFF_FB2 + 1, 0:64], 0.0)          # (1, 64)

    # ---- fc3 + ReLU
    fc3t = slab_ref[_OFF_FC3:_OFF_FC3 + 64, 0:32]              # (64, 32)
    h3 = jnp.maximum(
        jnp.dot(h2, fc3t, preferred_element_type=f32)
        + slab_ref[_OFF_FB3:_OFF_FB3 + 1, 0:32], 0.0)          # (1, 32)

    # ---- fc4 (out_features=1) as elementwise mul + lane reduce, then ReLU
    # (the module applies self.activation to fc4's output).
    w4 = slab_ref[_OFF_W4:_OFF_W4 + 1, 0:32]
    y = jnp.sum(h3 * w4, axis=1, keepdims=True) + slab_ref[_OFF_FB4:_OFF_FB4 + 1, 0:1]
    o_ref[...] = jnp.maximum(y, 0.0)


# ------------------------- one-time weight packing ------------------------- #

def prepare_params(params):
    """Run once: pack PyTorch-layout weights + selection constants into
    (g1cat bf16, conv2 weight pack f32, 128-lane-wide f32 slab)."""
    (c1_w, c1_b, c2_w, c2_b,
     fc1_w, fc1_b, fc2_w, fc2_b, fc3_w, fc3_b, fc4_w, fc4_b) = \
        [np.asarray(p, np.float32) for p in params]

    g1, p1, g2, q2 = _selection_constants()

    # conv weights packed per-tap along lanes, bias folded in as an extra col.
    w1aug = np.zeros((32, 80), np.float32)     # col t*8+c ; col 72 = bias
    w2aug = np.zeros((64, 296), np.float32)    # col t*32+c ; col 288 = bias
    for di in range(3):
        for dj in range(3):
            t = di * 3 + dj
            w1aug[:, t * 8:t * 8 + 6] = c1_w[:, :, di, dj]
            w2aug[:, t * 32:(t + 1) * 32] = c2_w[:, :, di, dj]
    w1aug[:, 72] = c1_b
    w2aug[:, 288] = c2_b

    slab = np.zeros((_SLAB_ROWS, 128), np.float32)
    slab[_OFF_P1:_OFF_P1 + 128, :] = p1
    slab[_OFF_G2:_OFF_G2 + 32, 0:108] = g2
    slab[_OFF_Q2:_OFF_Q2 + 12, 0:32] = q2
    slab[_OFF_W1:_OFF_W1 + 32, 0:80] = w1aug
    # fc1 per-h pack: fc1_pack_h[c, j] = fc1_w[j, c*3 + h]  (NCHW flatten order)
    for h in range(3):
        slab[_OFF_FC1 + 64 * h:_OFF_FC1 + 64 * (h + 1), :] = fc1_w[:, h::3].T
    slab[_OFF_FB1, :] = fc1_b
    slab[_OFF_FC2:_OFF_FC2 + 128, 0:64] = fc2_w.T
    slab[_OFF_FB2, 0:64] = fc2_b
    slab[_OFF_FC3:_OFF_FC3 + 64, 0:32] = fc3_w.T
    slab[_OFF_FB3, 0:32] = fc3_b
    slab[_OFF_W4, 0:32] = fc4_w[0]
    slab[_OFF_FB4, 0] = fc4_b[0]

    return (jnp.asarray(g1, jnp.bfloat16),      # 0/1 selector: exact in bf16
            jnp.asarray(w2aug, jnp.float32),
            jnp.asarray(slab, jnp.float32))


# -------------------------------- forward ---------------------------------- #

@jax.jit
def forward(x_nchw, packed):
    g1cat, w2aug, slab = packed
    # (1, 6, 18, 10) NCHW -> (6, 180) channel-major: a pure row-major reshape.
    x2d = x_nchw.reshape(_CIN, _H * _W).astype(jnp.float32)
    out = pl.pallas_call(
        _fused_forward_kernel,
        out_shape=jax.ShapeDtypeStruct((1, 1), jnp.float32),
        in_specs=[_VMEM, _VMEM, _VMEM, _VMEM],
        out_specs=_VMEM,
        scratch_shapes=[pltpu.VMEM((80, 128), jnp.float32),    # conv1 tap stack
                        pltpu.VMEM((296, 12), jnp.float32)],   # conv2 tap stack
        cost_estimate=pl.CostEstimate(flops=5_500_000,
                                      transcendentals=0,
                                      bytes_accessed=900_000),
    )(x2d, g1cat, w2aug, slab)
    return out.reshape(1)   # matches PyTorch output shape (1,)


# ------------------------- reference / param init -------------------------- #

def _reference_forward(x_nchw, params):
    (c1_w, c1_b, c2_w, c2_b,
     fc1_w, fc1_b, fc2_w, fc2_b, fc3_w, fc3_b, fc4_w, fc4_b) = params
    dn = ("NCHW", "OIHW", "NCHW")
    y = jax.lax.conv_general_dilated(x_nchw, c1_w, (1, 1), "VALID",
                                     dimension_numbers=dn)
    y = jnp.maximum(y + c1_b.reshape(1, -1, 1, 1), 0.0)
    y = jax.lax.reduce_window(y, -jnp.inf, jax.lax.max,
                              (1, 1, 2, 2), (1, 1, 2, 2), "VALID")
    y = jax.lax.conv_general_dilated(y, c2_w, (1, 1), "VALID",
                                     dimension_numbers=dn)
    y = jnp.maximum(y + c2_b.reshape(1, -1, 1, 1), 0.0)
    y = jax.lax.reduce_window(y, -jnp.inf, jax.lax.max,
                              (1, 1, 2, 2), (1, 1, 2, 2), "VALID")
    f = y.reshape(-1)
    h = jnp.maximum(fc1_w @ f + fc1_b, 0.0)
    h = jnp.maximum(fc2_w @ h + fc2_b, 0.0)
    h = jnp.maximum(fc3_w @ h + fc3_b, 0.0)
    return jnp.maximum(fc4_w @ h + fc4_b, 0.0)


def init_params(key):
    ks = jax.random.split(key, 12)

    def w(k, shape, fan_in):
        return jax.random.normal(k, shape, jnp.float32) / jnp.sqrt(float(fan_in))

    c1_w = w(ks[0], (32, 6, 3, 3), 6 * 9)
    c1_b = w(ks[1], (32,), 6 * 9)
    c2_w = w(ks[2], (64, 32, 3, 3), 32 * 9)
    c2_b = w(ks[3], (64,), 32 * 9)
    fc1_w = w(ks[4], (128, 192), 192); fc1_b = w(ks[5], (128,), 192)
    fc2_w = w(ks[6], (64, 128), 128);  fc2_b = w(ks[7], (64,), 128)
    fc3_w = w(ks[8], (32, 64), 64);    fc3_b = w(ks[9], (32,), 64)
    fc4_w = w(ks[10], (1, 32), 32);    fc4_b = w(ks[11], (1,), 32)
    return (c1_w, c1_b, c2_w, c2_b,
            fc1_w, fc1_b, fc2_w, fc2_b, fc3_w, fc3_b, fc4_w, fc4_b)


if __name__ == "__main__":
    key = jax.random.PRNGKey(0)
    k_x, k_p = jax.random.split(key)
    x = jax.random.normal(k_x, (1, 6, 18, 10), jnp.float32)

    params = init_params(k_p)
    packed = prepare_params(params)        # one-time weight/selector packing

    out = forward(x, packed)
    jax.block_until_ready(out)
    assert out.shape == (1,) and out.dtype == jnp.float32

    # Sanity-check against a pure-JAX reference (loose tolerance: MXU default
    # f32 matmul precision + bf16 gather inputs).
    ref = _reference_forward(x, params)
    np.testing.assert_allclose(np.asarray(out), np.asarray(ref),
                               rtol=5e-2, atol=5e-2)

    print("KERNEL_OK")
</pallas_src>

<mosaic_0001>
module attributes {stable_mosaic.version = 11 : i64} {
  func.func @_fused_forward_kernel(%arg0: memref<6x180xf32, #tpu.memory_space<vmem>>, %arg1: memref<180x1152xbf16, #tpu.memory_space<vmem>>, %arg2: memref<64x296xf32, #tpu.memory_space<vmem>>, %arg3: memref<632x128xf32, #tpu.memory_space<vmem>>, %arg4: memref<1x1xf32, #tpu.memory_space<vmem>>, %arg5: memref<80x128xf32, #tpu.memory_space<vmem>>, %arg6: memref<296x12xf32, #tpu.memory_space<vmem>>) attributes {dimension_semantics = [], scalar_prefetch = 0 : i64, scratch_operands = 2 : i64, tpu.core_type = #tpu.core_type<tc>} {
    %c0 = arith.constant 0 : index
    %c0_0 = arith.constant 0 : index
    %0 = vector.load %arg0[%c0, %c0_0] : memref<6x180xf32, #tpu.memory_space<vmem>>, vector<6x180xf32>
    %1 = arith.truncf %0 : vector<6x180xf32> to vector<6x180xbf16>
    %c0_1 = arith.constant 0 : index
    %c0_2 = arith.constant 0 : index
    %2 = vector.load %arg1[%c0_1, %c0_2] : memref<180x1152xbf16, #tpu.memory_space<vmem>>, vector<180x1152xbf16>
    %cst = arith.constant dense<0.000000e+00> : vector<6x1152xf32>
    %3 = tpu.matmul %1, %2, %cst {dimension_numbers = #tpu.dot_dimension_numbers<[1], [0], [0], [1], [0, 0, 1, 1], [], []>} : vector<6x180xbf16>, vector<180x1152xbf16>, vector<6x1152xf32> -> vector<6x1152xf32>
    %cst_3 = arith.constant 0.000000e+00 : f32
    %4 = vector.broadcast %cst_3 : f32 to vector<80x128xf32>
    %c0_4 = arith.constant 0 : index
    %c0_5 = arith.constant 0 : index
    %5 = vector.load %arg5[%c0_4, %c0_5] : memref<80x128xf32, #tpu.memory_space<vmem>>, vector<80x128xf32>
    tpu.vector_store %arg5[%c0_4, %c0_5], %4 {strides = array<i32>} : memref<80x128xf32, #tpu.memory_space<vmem>>, vector<80x128xf32>,
    %6 = vector.extract_strided_slice %3 {offsets = [0, 0], sizes = [6, 128], strides = [1, 1]} : vector<6x1152xf32> to vector<6x128xf32>
    %c0_6 = arith.constant 0 : index
    %c0_7 = arith.constant 0 : index
    %7 = vector.load %arg5[%c0_6, %c0_7] : memref<80x128xf32, #tpu.memory_space<vmem>>, vector<6x128xf32>
    tpu.vector_store %arg5[%c0_6, %c0_7], %6 {strides = array<i32>} : memref<80x128xf32, #tpu.memory_space<vmem>>, vector<6x128xf32>,
    %8 = vector.extract_strided_slice %3 {offsets = [0, 128], sizes = [6, 128], strides = [1, 1]} : vector<6x1152xf32> to vector<6x128xf32>
    %c8 = arith.constant 8 : index
    %c0_8 = arith.constant 0 : index
    %9 = vector.load %arg5[%c8, %c0_8] : memref<80x128xf32, #tpu.memory_space<vmem>>, vector<6x128xf32>
    tpu.vector_store %arg5[%c8, %c0_8], %8 {strides = array<i32>} : memref<80x128xf32, #tpu.memory_space<vmem>>, vector<6x128xf32>,
    %10 = vector.extract_strided_slice %3 {offsets = [0, 256], sizes = [6, 128], strides = [1, 1]} : vector<6x1152xf32> to vector<6x128xf32>
    %c16 = arith.constant 16 : index
    %c0_9 = arith.constant 0 : index
    %11 = vector.load %arg5[%c16, %c0_9] : memref<80x128xf32, #tpu.memory_space<vmem>>, vector<6x128xf32>
    tpu.vector_store %arg5[%c16, %c0_9], %10 {strides = array<i32>} : memref<80x128xf32, #tpu.memory_space<vmem>>, vector<6x128xf32>,
    %12 = vector.extract_strided_slice %3 {offsets = [0, 384], sizes = [6, 128], strides = [1, 1]} : vector<6x1152xf32> to vector<6x128xf32>
    %c24 = arith.constant 24 : index
    %c0_10 = arith.constant 0 : index
    %13 = vector.load %arg5[%c24, %c0_10] : memref<80x128xf32, #tpu.memory_space<vmem>>, vector<6x128xf32>
    tpu.vector_store %arg5[%c24, %c0_10], %12 {strides = array<i32>} : memref<80x128xf32, #tpu.memory_space<vmem>>, vector<6x128xf32>,
    %14 = vector.extract_strided_slice %3 {offsets = [0, 512], sizes = [6, 128], strides = [1, 1]} : vector<6x1152xf32> to vector<6x128xf32>
    %c32 = arith.constant 32 : index
    %c0_11 = arith.constant 0 : index
    %15 = vector.load %arg5[%c32, %c0_11] : memref<80x128xf32, #tpu.memory_space<vmem>>, vector<6x128xf32>
    tpu.vector_store %arg5[%c32, %c0_11], %14 {strides = array<i32>} : memref<80x128xf32, #tpu.memory_space<vmem>>, vector<6x128xf32>,
    %16 = vector.extract_strided_slice %3 {offsets = [0, 640], sizes = [6, 128], strides = [1, 1]} : vector<6x1152xf32> to vector<6x128xf32>
    %c40 = arith.constant 40 : index
    %c0_12 = arith.constant 0 : index
    %17 = vector.load %arg5[%c40, %c0_12] : memref<80x128xf32, #tpu.memory_space<vmem>>, vector<6x128xf32>
    tpu.vector_store %arg5[%c40, %c0_12], %16 {strides = array<i32>} : memref<80x128xf32, #tpu.memory_space<vmem>>, vector<6x128xf32>,
    %18 = vector.extract_strided_slice %3 {offsets = [0, 768], sizes = [6, 128], strides = [1, 1]} : vector<6x1152xf32> to vector<6x128xf32>
    %c48 = arith.constant 48 : index
    %c0_13 = arith.constant 0 : index
    %19 = vector.load %arg5[%c48, %c0_13] : memref<80x128xf32, #tpu.memory_space<vmem>>, vector<6x128xf32>
    tpu.vector_store %arg5[%c48, %c0_13], %18 {strides = array<i32>} : memref<80x128xf32, #tpu.memory_space<vmem>>, vector<6x128xf32>,
    %20 = vector.extract_strided_slice %3 {offsets = [0, 896], sizes = [6, 128], strides = [1, 1]} : vector<6x1152xf32> to vector<6x128xf32>
    %c56 = arith.constant 56 : index
    %c0_14 = arith.constant 0 : index
    %21 = vector.load %arg5[%c56, %c0_14] : memref<80x128xf32, #tpu.memory_space<vmem>>, vector<6x128xf32>
    tpu.vector_store %arg5[%c56, %c0_14], %20 {strides = array<i32>} : memref<80x128xf32, #tpu.memory_space<vmem>>, vector<6x128xf32>,
    %22 = vector.extract_strided_slice %3 {offsets = [0, 1024], sizes = [6, 128], strides = [1, 1]} : vector<6x1152xf32> to vector<6x128xf32>
    %c64 = arith.constant 64 : index
    %c0_15 = arith.constant 0 : index
    %23 = vector.load %arg5[%c64, %c0_15] : memref<80x128xf32, #tpu.memory_space<vmem>>, vector<6x128xf32>
    tpu.vector_store %arg5[%c64, %c0_15], %22 {strides = array<i32>} : memref<80x128xf32, #tpu.memory_space<vmem>>, vector<6x128xf32>,
    %cst_16 = arith.constant 1.000000e+00 : f32
    %24 = vector.broadcast %cst_16 : f32 to vector<1x128xf32>
    %c72 = arith.constant 72 : index
    %c0_17 = arith.constant 0 : index
    %25 = vector.load %arg5[%c72, %c0_17] : memref<80x128xf32, #tpu.memory_space<vmem>>, vector<1x128xf32>
    tpu.vector_store %arg5[%c72, %c0_17], %24 {strides = array<i32>} : memref<80x128xf32, #tpu.memory_space<vmem>>, vector<1x128xf32>,
    %c176 = arith.constant 176 : index
    %c0_18 = arith.constant 0 : index
    %26 = vector.load %arg3[%c176, %c0_18] : memref<632x128xf32, #tpu.memory_space<vmem>>, vector<32x80xf32>
    %c0_19 = arith.constant 0 : index
    %c0_20 = arith.constant 0 : index
    %27 = vector.load %arg5[%c0_19, %c0_20] : memref<80x128xf32, #tpu.memory_space<vmem>>, vector<80x128xf32>
    %cst_21 = arith.constant dense<0.000000e+00> : vector<32x128xf32>
    %28 = tpu.matmul %26, %27, %cst_21 {dimension_numbers = #tpu.dot_dimension_numbers<[1], [0], [0], [1], [0, 0, 1, 1], [], []>} : vector<32x80xf32>, vector<80x128xf32>, vector<32x128xf32> -> vector<32x128xf32>
    %cst_22 = arith.constant 0.000000e+00 : f32
    %29 = vector.broadcast %cst_22 : f32 to vector<32x128xf32>
    %30 = arith.maximumf %28, %29 : vector<32x128xf32>
    %c0_23 = arith.constant 0 : index
    %c0_24 = arith.constant 0 : index
    %31 = vector.load %arg3[%c0_23, %c0_24] : memref<632x128xf32, #tpu.memory_space<vmem>>, vector<128x128xf32>
    %cst_25 = arith.constant dense<0.000000e+00> : vector<32x128xf32>
    %32 = tpu.matmul %30, %31, %cst_25 {dimension_numbers = #tpu.dot_dimension_numbers<[1], [0], [0], [1], [0, 0, 1, 1], [], []>} : vector<32x128xf32>, vector<128x128xf32>, vector<32x128xf32> -> vector<32x128xf32>
    %33 = vector.extract_strided_slice %32 {offsets = [0, 0], sizes = [32, 32], strides = [1, 1]} : vector<32x128xf32> to vector<32x32xf32>
    %34 = vector.extract_strided_slice %32 {offsets = [0, 32], sizes = [32, 32], strides = [1, 1]} : vector<32x128xf32> to vector<32x32xf32>
    %35 = arith.maximumf %33, %34 : vector<32x32xf32>
    %36 = vector.extract_strided_slice %32 {offsets = [0, 64], sizes = [32, 32], strides = [1, 1]} : vector<32x128xf32> to vector<32x32xf32>
    %37 = vector.extract_strided_slice %32 {offsets = [0, 96], sizes = [32, 32], strides = [1, 1]} : vector<32x128xf32> to vector<32x32xf32>
    %38 = arith.maximumf %36, %37 : vector<32x32xf32>
    %39 = arith.maximumf %35, %38 : vector<32x32xf32>
    %c128 = arith.constant 128 : index
    %c0_26 = arith.constant 0 : index
    %40 = vector.load %arg3[%c128, %c0_26] : memref<632x128xf32, #tpu.memory_space<vmem>>, vector<32x108xf32>
    %cst_27 = arith.constant dense<0.000000e+00> : vector<32x108xf32>
    %41 = tpu.matmul %39, %40, %cst_27 {dimension_numbers = #tpu.dot_dimension_numbers<[1], [0], [0], [1], [0, 0, 1, 1], [], []>} : vector<32x32xf32>, vector<32x108xf32>, vector<32x108xf32> -> vector<32x108xf32>
    %cst_28 = arith.constant 0.000000e+00 : f32
    %42 = vector.broadcast %cst_28 : f32 to vector<296x12xf32>
    %c0_29 = arith.constant 0 : index
    %c0_30 = arith.constant 0 : index
    %43 = vector.load %arg6[%c0_29, %c0_30] : memref<296x12xf32, #tpu.memory_space<vmem>>, vector<296x12xf32>
    tpu.vector_store %arg6[%c0_29, %c0_30], %42 {strides = array<i32>} : memref<296x12xf32, #tpu.memory_space<vmem>>, vector<296x12xf32>,
    %44 = vector.extract_strided_slice %41 {offsets = [0, 0], sizes = [32, 12], strides = [1, 1]} : vector<32x108xf32> to vector<32x12xf32>
    %c0_31 = arith.constant 0 : index
    %c0_32 = arith.constant 0 : index
    %45 = vector.load %arg6[%c0_31, %c0_32] : memref<296x12xf32, #tpu.memory_space<vmem>>, vector<32x12xf32>
    tpu.vector_store %arg6[%c0_31, %c0_32], %44 {strides = array<i32>} : memref<296x12xf32, #tpu.memory_space<vmem>>, vector<32x12xf32>,
    %46 = vector.extract_strided_slice %41 {offsets = [0, 12], sizes = [32, 12], strides = [1, 1]} : vector<32x108xf32> to vector<32x12xf32>
    %c32_33 = arith.constant 32 : index
    %c0_34 = arith.constant 0 : index
    %47 = vector.load %arg6[%c32_33, %c0_34] : memref<296x12xf32, #tpu.memory_space<vmem>>, vector<32x12xf32>
    tpu.vector_store %arg6[%c32_33, %c0_34], %46 {strides = array<i32>} : memref<296x12xf32, #tpu.memory_space<vmem>>, vector<32x12xf32>,
    %48 = vector.extract_strided_slice %41 {offsets = [0, 24], sizes = [32, 12], strides = [1, 1]} : vector<32x108xf32> to vector<32x12xf32>
    %c64_35 = arith.constant 64 : index
    %c0_36 = arith.constant 0 : index
    %49 = vector.load %arg6[%c64_35, %c0_36] : memref<296x12xf32, #tpu.memory_space<vmem>>, vector<32x12xf32>
    tpu.vector_store %arg6[%c64_35, %c0_36], %48 {strides = array<i32>} : memref<296x12xf32, #tpu.memory_space<vmem>>, vector<32x12xf32>,
    %50 = vector.extract_strided_slice %41 {offsets = [0, 36], sizes = [32, 12], strides = [1, 1]} : vector<32x108xf32> to vector<32x12xf32>
    %c96 = arith.constant 96 : index
    %c0_37 = arith.constant 0 : index
    %51 = vector.load %arg6[%c96, %c0_37] : memref<296x12xf32, #tpu.memory_space<vmem>>, vector<32x12xf32>
    tpu.vector_store %arg6[%c96, %c0_37], %50 {strides = array<i32>} : memref<296x12xf32, #tpu.memory_space<vmem>>, vector<32x12xf32>,
    %52 = vector.extract_strided_slice %41 {offsets = [0, 48], sizes = [32, 12], strides = [1, 1]} : vector<32x108xf32> to vector<32x12xf32>
    %c128_38 = arith.constant 128 : index
    %c0_39 = arith.constant 0 : index
    %53 = vector.load %arg6[%c128_38, %c0_39] : memref<296x12xf32, #tpu.memory_space<vmem>>, vector<32x12xf32>
    tpu.vector_store %arg6[%c128_38, %c0_39], %52 {strides = array<i32>} : memref<296x12xf32, #tpu.memory_space<vmem>>, vector<32x12xf32>,
    %54 = vector.extract_strided_slice %41 {offsets = [0, 60], sizes = [32, 12], strides = [1, 1]} : vector<32x108xf32> to vector<32x12xf32>
    %c160 = arith.constant 160 : index
    %c0_40 = arith.constant 0 : index
    %55 = vector.load %arg6[%c160, %c0_40] : memref<296x12xf32, #tpu.memory_space<vmem>>, vector<32x12xf32>
    tpu.vector_store %arg6[%c160, %c0_40], %54 {strides = array<i32>} : memref<296x12xf32, #tpu.memory_space<vmem>>, vector<32x12xf32>,
    %56 = vector.extract_strided_slice %41 {offsets = [0, 72], sizes = [32, 12], strides = [1, 1]} : vector<32x108xf32> to vector<32x12xf32>
    %c192 = arith.constant 192 : index
    %c0_41 = arith.constant 0 : index
    %57 = vector.load %arg6[%c192, %c0_41] : memref<296x12xf32, #tpu.memory_space<vmem>>, vector<32x12xf32>
    tpu.vector_store %arg6[%c192, %c0_41], %56 {strides = array<i32>} : memref<296x12xf32, #tpu.memory_space<vmem>>, vector<32x12xf32>,
    %58 = vector.extract_strided_slice %41 {offsets = [0, 84], sizes = [32, 12], strides = [1, 1]} : vector<32x108xf32> to vector<32x12xf32>
    %c224 = arith.constant 224 : index
    %c0_42 = arith.constant 0 : index
    %59 = vector.load %arg6[%c224, %c0_42] : memref<296x12xf32, #tpu.memory_space<vmem>>, vector<32x12xf32>
    tpu.vector_store %arg6[%c224, %c0_42], %58 {strides = array<i32>} : memref<296x12xf32, #tpu.memory_space<vmem>>, vector<32x12xf32>,
    %60 = vector.extract_strided_slice %41 {offsets = [0, 96], sizes = [32, 12], strides = [1, 1]} : vector<32x108xf32> to vector<32x12xf32>
    %c256 = arith.constant 256 : index
    %c0_43 = arith.constant 0 : index
    %61 = vector.load %arg6[%c256, %c0_43] : memref<296x12xf32, #tpu.memory_space<vmem>>, vector<32x12xf32>
    tpu.vector_store %arg6[%c256, %c0_43], %60 {strides = array<i32>} : memref<296x12xf32, #tpu.memory_space<vmem>>, vector<32x12xf32>,
    %cst_44 = arith.constant 1.000000e+00 : f32
    %62 = vector.broadcast %cst_44 : f32 to vector<1x12xf32>
    %c288 = arith.constant 288 : index
    %c0_45 = arith.constant 0 : index
    %63 = vector.load %arg6[%c288, %c0_45] : memref<296x12xf32, #tpu.memory_space<vmem>>, vector<1x12xf32>
    tpu.vector_store %arg6[%c288, %c0_45], %62 {strides = array<i32>} : memref<296x12xf32, #tpu.memory_space<vmem>>, vector<1x12xf32>,
    %c0_46 = arith.constant 0 : index
    %c0_47 = arith.constant 0 : index
    %64 = vector.load %arg2[%c0_46, %c0_47] : memref<64x296xf32, #tpu.memory_space<vmem>>, vector<64x296xf32>
    %c0_48 = arith.constant 0 : index
    %c0_49 = arith.constant 0 : index
    %65 = vector.load %arg6[%c0_48, %c0_49] : memref<296x12xf32, #tpu.memory_space<vmem>>, vector<296x12xf32>
    %cst_50 = arith.constant dense<0.000000e+00> : vector<64x12xf32>
    %66 = tpu.matmul %64, %65, %cst_50 {dimension_numbers = #tpu.dot_dimension_numbers<[1], [0], [0], [1], [0, 0, 1, 1], [], []>} : vector<64x296xf32>, vector<296x12xf32>, vector<64x12xf32> -> vector<64x12xf32>
    %cst_51 = arith.constant 0.000000e+00 : f32
    %67 = vector.broadcast %cst_51 : f32 to vector<64x12xf32>
    %68 = arith.maximumf %66, %67 : vector<64x12xf32>
    %c160_52 = arith.constant 160 : index
    %c0_53 = arith.constant 0 : index
    %69 = vector.load %arg3[%c160_52, %c0_53] : memref<632x128xf32, #tpu.memory_space<vmem>>, vector<12x32xf32>
    %cst_54 = arith.constant dense<0.000000e+00> : vector<64x32xf32>
    %70 = tpu.matmul %68, %69, %cst_54 {dimension_numbers = #tpu.dot_dimension_numbers<[1], [0], [0], [1], [0, 0, 1, 1], [], []>} : vector<64x12xf32>, vector<12x32xf32>, vector<64x32xf32> -> vector<64x32xf32>
    %71 = vector.extract_strided_slice %70 {offsets = [0, 0], sizes = [64, 8], strides = [1, 1]} : vector<64x32xf32> to vector<64x8xf32>
    %72 = vector.extract_strided_slice %70 {offsets = [0, 8], sizes = [64, 8], strides = [1, 1]} : vector<64x32xf32> to vector<64x8xf32>
    %73 = arith.maximumf %71, %72 : vector<64x8xf32>
    %74 = vector.extract_strided_slice %70 {offsets = [0, 16], sizes = [64, 8], strides = [1, 1]} : vector<64x32xf32> to vector<64x8xf32>
    %75 = vector.extract_strided_slice %70 {offsets = [0, 24], sizes = [64, 8], strides = [1, 1]} : vector<64x32xf32> to vector<64x8xf32>
    %76 = arith.maximumf %74, %75 : vector<64x8xf32>
    %77 = arith.maximumf %73, %76 : vector<64x8xf32>
    %c400 = arith.constant 400 : index
    %c0_55 = arith.constant 0 : index
    %78 = vector.load %arg3[%c400, %c0_55] : memref<632x128xf32, #tpu.memory_space<vmem>>, vector<1x128xf32>
    %c208 = arith.constant 208 : index
    %c0_56 = arith.constant 0 : index
    %79 = vector.load %arg3[%c208, %c0_56] : memref<632x128xf32, #tpu.memory_space<vmem>>, vector<64x128xf32>
    %80 = vector.extract_strided_slice %77 {offsets = [0, 0], sizes = [64, 1], strides = [1, 1]} : vector<64x8xf32> to vector<64x1xf32>
    %81 = vector.broadcast %80 : vector<64x1xf32> to vector<64x128xf32>
    %82 = arith.mulf %81, %79 : vector<64x128xf32>
    %cst_57 = arith.constant dense<0.000000e+00> : vector<128xf32>
    %83 = vector.multi_reduction <add>, %82, %cst_57 [0] : vector<64x128xf32> to vector<128xf32>
    %84 = vector.shape_cast %83 : vector<128xf32> to vector<1x128xf32>
    %85 = arith.addf %78, %84 : vector<1x128xf32>
    %c272 = arith.constant 272 : index
    %c0_58 = arith.constant 0 : index
    %86 = vector.load %arg3[%c272, %c0_58] : memref<632x128xf32, #tpu.memory_space<vmem>>, vector<64x128xf32>
    %87 = vector.extract_strided_slice %77 {offsets = [0, 1], sizes = [64, 1], strides = [1, 1]} : vector<64x8xf32> to vector<64x1xf32>
    %88 = vector.broadcast %87 : vector<64x1xf32> to vector<64x128xf32>
    %89 = arith.mulf %88, %86 : vector<64x128xf32>
    %cst_59 = arith.constant dense<0.000000e+00> : vector<128xf32>
    %90 = vector.multi_reduction <add>, %89, %cst_59 [0] : vector<64x128xf32> to vector<128xf32>
    %91 = vector.shape_cast %90 : vector<128xf32> to vector<1x128xf32>
    %92 = arith.addf %85, %91 : vector<1x128xf32>
    %c336 = arith.constant 336 : index
    %c0_60 = arith.constant 0 : index
    %93 = vector.load %arg3[%c336, %c0_60] : memref<632x128xf32, #tpu.memory_space<vmem>>, vector<64x128xf32>
    %94 = vector.extract_strided_slice %77 {offsets = [0, 2], sizes = [64, 1], strides = [1, 1]} : vector<64x8xf32> to vector<64x1xf32>
    %95 = vector.broadcast %94 : vector<64x1xf32> to vector<64x128xf32>
    %96 = arith.mulf %95, %93 : vector<64x128xf32>
    %cst_61 = arith.constant dense<0.000000e+00> : vector<128xf32>
    %97 = vector.multi_reduction <add>, %96, %cst_61 [0] : vector<64x128xf32> to vector<128xf32>
    %98 = vector.shape_cast %97 : vector<128xf32> to vector<1x128xf32>
    %99 = arith.addf %92, %98 : vector<1x128xf32>
    %cst_62 = arith.constant 0.000000e+00 : f32
    %100 = vector.broadcast %cst_62 : f32 to vector<1x128xf32>
    %101 = arith.maximumf %99, %100 : vector<1x128xf32>
    %c408 = arith.constant 408 : index
    %c0_63 = arith.constant 0 : index
    %102 = vector.load %arg3[%c408, %c0_63] : memref<632x128xf32, #tpu.memory_space<vmem>>, vector<128x64xf32>
    %cst_64 = arith.constant dense<0.000000e+00> : vector<1x64xf32>
    %103 = tpu.matmul %101, %102, %cst_64 {dimension_numbers = #tpu.dot_dimension_numbers<[1], [0], [0], [1], [0, 0, 1, 1], [], []>} : vector<1x128xf32>, vector<128x64xf32>, vector<1x64xf32> -> vector<1x64xf32>
    %c536 = arith.constant 536 : index
    %c0_65 = arith.constant 0 : index
    %104 = vector.load %arg3[%c536, %c0_65] : memref<632x128xf32, #tpu.memory_space<vmem>>, vector<1x64xf32>
    %105 = arith.addf %103, %104 : vector<1x64xf32>
    %cst_66 = arith.constant 0.000000e+00 : f32
    %106 = vector.broadcast %cst_66 : f32 to vector<1x64xf32>
    %107 = arith.maximumf %105, %106 : vector<1x64xf32>
    %c544 = arith.constant 544 : index
    %c0_67 = arith.constant 0 : index
    %108 = vector.load %arg3[%c544, %c0_67] : memref<632x128xf32, #tpu.memory_space<vmem>>, vector<64x32xf32>
    %cst_68 = arith.constant dense<0.000000e+00> : vector<1x32xf32>
    %109 = tpu.matmul %107, %108, %cst_68 {dimension_numbers = #tpu.dot_dimension_numbers<[1], [0], [0], [1], [0, 0, 1, 1], [], []>} : vector<1x64xf32>, vector<64x32xf32>, vector<1x32xf32> -> vector<1x32xf32>
    %c608 = arith.constant 608 : index
    %c0_69 = arith.constant 0 : index
    %110 = vector.load %arg3[%c608, %c0_69] : memref<632x128xf32, #tpu.memory_space<vmem>>, vector<1x32xf32>
    %111 = arith.addf %109, %110 : vector<1x32xf32>
    %cst_70 = arith.constant 0.000000e+00 : f32
    %112 = vector.broadcast %cst_70 : f32 to vector<1x32xf32>
    %113 = arith.maximumf %111, %112 : vector<1x32xf32>
    %c616 = arith.constant 616 : index
    %c0_71 = arith.constant 0 : index
    %114 = vector.load %arg3[%c616, %c0_71] : memref<632x128xf32, #tpu.memory_space<vmem>>, vector<1x32xf32>
    %115 = arith.mulf %113, %114 : vector<1x32xf32>
    %cst_72 = arith.constant dense<0.000000e+00> : vector<1xf32>
    %116 = vector.multi_reduction <add>, %115, %cst_72 [1] : vector<1x32xf32> to vector<1xf32>
    %117 = vector.shape_cast %116 : vector<1xf32> to vector<1x1xf32>
    %c624 = arith.constant 624 : index
    %c0_73 = arith.constant 0 : index
    %118 = vector.load %arg3[%c624, %c0_73] : memref<632x128xf32, #tpu.memory_space<vmem>>, vector<1x1xf32>
    %119 = arith.addf %117, %118 : vector<1x1xf32>
    %cst_74 = arith.constant 0.000000e+00 : f32
    %120 = vector.broadcast %cst_74 : f32 to vector<1x1xf32>
    %121 = arith.maximumf %119, %120 : vector<1x1xf32>
    %c0_75 = arith.constant 0 : index
    %c0_76 = arith.constant 0 : index
    %122 = vector.load %arg4[%c0_75, %c0_76] : memref<1x1xf32, #tpu.memory_space<vmem>>, vector<1x1xf32>
    tpu.vector_store %arg4[%c0_75, %c0_76], %121 {strides = array<i32>} : memref<1x1xf32, #tpu.memory_space<vmem>>, vector<1x1xf32>,
    return
  }
}

</mosaic_0001>

<llo_original>
// kernel: forward.1
$region0: #{forward.1}
  #allocation0 [shape = 'u32[]', space=smem, size = 0x4, offset = 0x4, fixed_abs, tag = 'smem constant byte address 0x4 - core index']
  #allocation1 [shape = 'u32[144,128]{1,0:T(1,128)}', space=vmem, size = 0x12000, scoped, tag = 'internal scratch']
  #allocation2 [shape = 'f32[80,128]{1,0:T(8,128)}', space=vmem, size = 0xa000, scoped, tag = 'scratch operand']
  #allocation3 [shape = 'f32[296,12]{1,0:T(8,128)}', space=vmem, size = 0x25000, scoped, tag = 'scratch operand']
  %s0 = inlined_call_operand.vmem [shape: f32[6,180], index: 0, kind: input, shape index: {}]
  %s1 = inlined_call_operand.hbm [shape: bf16[180,1152], index: 1, kind: input, shape index: {}]
  %s2 = inlined_call_operand.vmem [shape: f32[64,296], index: 2, kind: input, shape index: {}]
  %s3 = inlined_call_operand.hbm [shape: f32[632,128], index: 3, kind: input, shape index: {}]
  %s4 = inlined_call_operand.hbm [shape: f32[1,1], index: 4, kind: output, shape index: {}]
  %s5 = sld [smem:[#allocation0]]
  $region34: #{forward.1} parent=0
    _
  %s7 = ssub.s32 1, %s5
  %s8 = scalar_select 0, %s7, %s5
  $region1: #{forward.1} parent=0
    #allocation4 [shape = 'u8[423936]{0}', space=vmem, size = 0x67800, scoped, tag = 'input window, operand 1, single buffered']
    #allocation5 [shape = 's32[1]{0}', space=sflag, size = 0x4, scoped, tag = 'scoped memory for forward.1']
    #allocation6 [shape = 's32[1]{0}', space=sflag, size = 0x4, scoped, tag = 'scoped memory for forward.1']
    #allocation7 [shape = 'u8[323584]{0}', space=vmem, size = 0x4f000, scoped, tag = 'input window, operand 3, single buffered']
    #allocation8 [shape = 's32[1]{0}', space=sflag, size = 0x4, scoped, tag = 'scoped memory for forward.1']
    #allocation9 [shape = 'u8[512]{0}', space=vmem, size = 0x400, scoped, tag = 'output window, operand 0, single buffered']
    %9 = vsyncpa [#allocation5], 0
    %10 = vsyncpa [#allocation8], 0
    %11 = vsyncpa [#allocation6], 0
    // Predicated region
    $region2: #{forward.1} parent=1 // pred_check
      _
    $region3: #{forward.1} parent=1 // pred_check_branch
      %13 = sbr.rel (0) target = $region5
    $region4: #{forward.1} parent=1 // pred_region
      _
    $region5: #{forward.1} parent=1 // pred_fallthru
      _
    // Predicated region
    $region6: #{forward.1} parent=1 // pred_check
      _
    $region7: #{forward.1} parent=1 // pred_check_branch
      %15 = sbr.rel (0) target = $region9
    $region8: #{forward.1} parent=1 // pred_region
      %s17 = ssub.s32 13248, 13248
      %18 = vsyncadd [#allocation5], %s17
      %s19 = sshll.u32 [#allocation4], 4
      %s20 = int_to_ptr.vmem [resolvable:$true] %s19
      %25 = dma.hbm_to_vmem [thread:$0]  %s1, 13248, %s20, [#allocation5], 576, 576, 36
    $region9: #{forward.1} parent=1 // pred_fallthru
      _
    // Predicated region
    $region10: #{forward.1} parent=1 // pred_check
      _
    $region11: #{forward.1} parent=1 // pred_check_branch
      %27 = sbr.rel (0) target = $region13
    $region12: #{forward.1} parent=1 // pred_region
      _
    $region13: #{forward.1} parent=1 // pred_fallthru
      _
    // Predicated region
    $region14: #{forward.1} parent=1 // pred_check
      _
    $region15: #{forward.1} parent=1 // pred_check_branch
      %29 = sbr.rel (0) target = $region17
    $region16: #{forward.1} parent=1 // pred_region
      %s31 = ssub.s32 10112, 10112
      %32 = vsyncadd [#allocation8], %s31
      %s33 = sshll.u32 [#allocation7], 4
      %s34 = int_to_ptr.vmem [resolvable:$true] %s33
      %39 = dma.hbm_to_vmem [thread:$0]  %s3, 10112, %s34, [#allocation8], 128, 128, 8
    $region17: #{forward.1} parent=1 // pred_fallthru
      _
    // Predicated region
    $region18: #{forward.1} parent=1 // pred_check
      _
    $region19: #{forward.1} parent=1 // pred_check_branch
      %41 = sbr.rel (0) target = $region21
    $region20: #{forward.1} parent=1 // pred_region
      %42 = dma.done [#allocation5], 13248
    $region21: #{forward.1} parent=1 // pred_fallthru
      _
    // Predicated region
    $region22: #{forward.1} parent=1 // pred_check
      _
    $region23: #{forward.1} parent=1 // pred_check_branch
      %44 = sbr.rel (0) target = $region25
    $region24: #{forward.1} parent=1 // pred_region
      %45 = dma.done [#allocation8], 10112
    $region25: #{forward.1} parent=1 // pred_fallthru
      _
    %v47 = vld [vmem:[%s0] sm:$0x3f]
    %v48 = vld [vmem:[%s0 + $0x8] sm:$0x3f]
    %v49 = vpack.c.bf16 %v47, %v47
    %v50 = vpack.c.bf16 %v48, %v48
    %v51 = vld [vmem:[#allocation4] sm:$0xff]
    %v52 = vld [vmem:[#allocation4 + $0x8] sm:$0xff]
    %v53 = vld [vmem:[#allocation4 + $0x10] sm:$0xff]
    %v54 = vld [vmem:[#allocation4 + $0x18] sm:$0xff]
    %v55 = vld [vmem:[#allocation4 + $0x20] sm:$0xf]
    %v56 = vld [vmem:[#allocation4 + $0x24] sm:$0xff]
    %v57 = vld [vmem:[#allocation4 + $0x2c] sm:$0xff]
    %v58 = vld [vmem:[#allocation4 + $0x34] sm:$0xff]
    %v59 = vld [vmem:[#allocation4 + $0x3c] sm:$0xff]
    %v60 = vld [vmem:[#allocation4 + $0x44] sm:$0xf]
    %v61 = vld [vmem:[#allocation4 + $0x48] sm:$0xff]
    %v62 = vld [vmem:[#allocation4 + $0x50] sm:$0xff]
    %v63 = vld [vmem:[#allocation4 + $0x58] sm:$0xff]
    %v64 = vld [vmem:[#allocation4 + $0x60] sm:$0xff]
    %v65 = vld [vmem:[#allocation4 + $0x68] sm:$0xf]
    %v66 = vld [vmem:[#allocation4 + $0x6c] sm:$0xff]
    %v67 = vld [vmem:[#allocation4 + $0x74] sm:$0xff]
    %v68 = vld [vmem:[#allocation4 + $0x7c] sm:$0xff]
    %v69 = vld [vmem:[#allocation4 + $0x84] sm:$0xff]
    %v70 = vld [vmem:[#allocation4 + $0x8c] sm:$0xf]
    %v71 = vld [vmem:[#allocation4 + $0x90] sm:$0xff]
    %v72 = vld [vmem:[#allocation4 + $0x98] sm:$0xff]
    %v73 = vld [vmem:[#allocation4 + $0xa0] sm:$0xff]
    %v74 = vld [vmem:[#allocation4 + $0xa8] sm:$0xff]
    %v75 = vld [vmem:[#allocation4 + $0xb0] sm:$0xf]
    %v76 = vld [vmem:[#allocation4 + $0xb4] sm:$0xff]
    %v77 = vld [vmem:[#allocation4 + $0xbc] sm:$0xff]
    %v78 = vld [vmem:[#allocation4 + $0xc4] sm:$0xff]
    %v79 = vld [vmem:[#allocation4 + $0xcc] sm:$0xff]
    %v80 = vld [vmem:[#allocation4 + $0xd4] sm:$0xf]
    %v81 = vld [vmem:[#allocation4 + $0xd8] sm:$0xff]
    %v82 = vld [vmem:[#allocation4 + $0xe0] sm:$0xff]
    %v83 = vld [vmem:[#allocation4 + $0xe8] sm:$0xff]
    %v84 = vld [vmem:[#allocation4 + $0xf0] sm:$0xff]
    %v85 = vld [vmem:[#allocation4 + $0xf8] sm:$0xf]
    %v86 = vld [vmem:[#allocation4 + $0xfc] sm:$0xff]
    %v87 = vld [vmem:[#allocation4 + $0x104] sm:$0xff]
    %v88 = vld [vmem:[#allocation4 + $0x10c] sm:$0xff]
    %v89 = vld [vmem:[#allocation4 + $0x114] sm:$0xff]
    %v90 = vld [vmem:[#allocation4 + $0x11c] sm:$0xf]
    %v91 = vld [vmem:[#allocation4 + $0x120] sm:$0xff]
    %v92 = vld [vmem:[#allocation4 + $0x128] sm:$0xff]
    %v93 = vld [vmem:[#allocation4 + $0x130] sm:$0xff]
    %v94 = vld [vmem:[#allocation4 + $0x138] sm:$0xff]
    %v95 = vld [vmem:[#allocation4 + $0x140] sm:$0xf]
    %v96 = vld [vmem:[#allocation4 + $0x144] sm:$0xff]
    %v97 = vld [vmem:[#allocation4 + $0x14c] sm:$0xff]
    %v98 = vld [vmem:[#allocation4 + $0x154] sm:$0xff]
    %v99 = vld [vmem:[#allocation4 + $0x15c] sm:$0xff]
    %v100 = vld [vmem:[#allocation4 + $0x164] sm:$0xf]
    %v101 = vld [vmem:[#allocation4 + $0x168] sm:$0xff]
    %v102 = vld [vmem:[#allocation4 + $0x170] sm:$0xff]
    %v103 = vld [vmem:[#allocation4 + $0x178] sm:$0xff]
    %v104 = vld [vmem:[#allocation4 + $0x180] sm:$0xff]
    %v105 = vld [vmem:[#allocation4 + $0x188] sm:$0xf]
    %v106 = vld [vmem:[#allocation4 + $0x18c] sm:$0xff]
    %v107 = vld [vmem:[#allocation4 + $0x194] sm:$0xff]
    %v108 = vld [vmem:[#allocation4 + $0x19c] sm:$0xff]
    %v109 = vld [vmem:[#allocation4 + $0x1a4] sm:$0xff]
    %v110 = vld [vmem:[#allocation4 + $0x1ac] sm:$0xf]
    %v111 = vld [vmem:[#allocation4 + $0x1b0] sm:$0xff]
    %v112 = vld [vmem:[#allocation4 + $0x1b8] sm:$0xff]
    %v113 = vld [vmem:[#allocation4 + $0x1c0] sm:$0xff]
    %v114 = vld [vmem:[#allocation4 + $0x1c8] sm:$0xff]
    %v115 = vld [vmem:[#allocation4 + $0x1d0] sm:$0xf]
    %v116 = vld [vmem:[#allocation4 + $0x1d4] sm:$0xff]
    %v117 = vld [vmem:[#allocation4 + $0x1dc] sm:$0xff]
    %v118 = vld [vmem:[#allocation4 + $0x1e4] sm:$0xff]
    %v119 = vld [vmem:[#allocation4 + $0x1ec] sm:$0xff]
    %v120 = vld [vmem:[#allocation4 + $0x1f4] sm:$0xf]
    %v121 = vld [vmem:[#allocation4 + $0x1f8] sm:$0xff]
    %v122 = vld [vmem:[#allocation4 + $0x200] sm:$0xff]
    %v123 = vld [vmem:[#allocation4 + $0x208] sm:$0xff]
    %v124 = vld [vmem:[#allocation4 + $0x210] sm:$0xff]
    %v125 = vld [vmem:[#allocation4 + $0x218] sm:$0xf]
    %v126 = vld [vmem:[#allocation4 + $0x21c] sm:$0xff]
    %v127 = vld [vmem:[#allocation4 + $0x224] sm:$0xff]
    %v128 = vld [vmem:[#allocation4 + $0x22c] sm:$0xff]
    %v129 = vld [vmem:[#allocation4 + $0x234] sm:$0xff]
    %v130 = vld [vmem:[#allocation4 + $0x23c] sm:$0xf]
    %v131 = vld [vmem:[#allocation4 + $0x240] sm:$0xff]
    %v132 = vld [vmem:[#allocation4 + $0x248] sm:$0xff]
    %v133 = vld [vmem:[#allocation4 + $0x250] sm:$0xff]
    %v134 = vld [vmem:[#allocation4 + $0x258] sm:$0xff]
    %v135 = vld [vmem:[#allocation4 + $0x260] sm:$0xf]
    %v136 = vld [vmem:[#allocation4 + $0x264] sm:$0xff]
    %v137 = vld [vmem:[#allocation4 + $0x26c] sm:$0xff]
    %v138 = vld [vmem:[#allocation4 + $0x274] sm:$0xff]
    %v139 = vld [vmem:[#allocation4 + $0x27c] sm:$0xff]
    %v140 = vld [vmem:[#allocation4 + $0x284] sm:$0xf]
    %v141 = vld [vmem:[#allocation4 + $0x288] sm:$0xff]
    %v142 = vld [vmem:[#allocation4 + $0x290] sm:$0xff]
    %v143 = vld [vmem:[#allocation4 + $0x298] sm:$0xff]
    %v144 = vld [vmem:[#allocation4 + $0x2a0] sm:$0xff]
    %v145 = vld [vmem:[#allocation4 + $0x2a8] sm:$0xf]
    %v146 = vld [vmem:[#allocation4 + $0x2ac] sm:$0xff]
    %v147 = vld [vmem:[#allocation4 + $0x2b4] sm:$0xff]
    %v148 = vld [vmem:[#allocation4 + $0x2bc] sm:$0xff]
    %v149 = vld [vmem:[#allocation4 + $0x2c4] sm:$0xff]
    %v150 = vld [vmem:[#allocation4 + $0x2cc] sm:$0xf]
    %v151 = vld [vmem:[#allocation4 + $0x2d0] sm:$0xff]
    %v152 = vld [vmem:[#allocation4 + $0x2d8] sm:$0xff]
    %v153 = vld [vmem:[#allocation4 + $0x2e0] sm:$0xff]
    %v154 = vld [vmem:[#allocation4 + $0x2e8] sm:$0xff]
    %v155 = vld [vmem:[#allocation4 + $0x2f0] sm:$0xf]
    %v156 = vld [vmem:[#allocation4 + $0x2f4] sm:$0xff]
    %v157 = vld [vmem:[#allocation4 + $0x2fc] sm:$0xff]
    %v158 = vld [vmem:[#allocation4 + $0x304] sm:$0xff]
    %v159 = vld [vmem:[#allocation4 + $0x30c] sm:$0xff]
    %v160 = vld [vmem:[#allocation4 + $0x314] sm:$0xf]
    %v161 = vld [vmem:[#allocation4 + $0x318] sm:$0x33]
    %v162 = vld [vmem:[#allocation4 + $0x320] sm:$0x33]
    %v163 = vld [vmem:[#allocation4 + $0x328] sm:$0x33]
    %v164 = vld [vmem:[#allocation4 + $0x330] sm:$0x33]
    %v165 = vld [vmem:[#allocation4 + $0x338] sm:$0x3]
    %v281 = vunpack.c.l.b16 %v51
    %v282 = vunpack.c.h.b16 %v51
    %v283 = vunpack.c.l.b16 %v52
    %v284 = vunpack.c.h.b16 %v52
    %v285 = vunpack.c.l.b16 %v53
    %v286 = vunpack.c.h.b16 %v53
    %v287 = vunpack.c.l.b16 %v54
    %v288 = vunpack.c.h.b16 %v54
    %v289 = vunpack.c.l.b16 %v55
    %v290 = vunpack.c.l.b16 %v56
    %v291 = vunpack.c.h.b16 %v56
    %v292 = vunpack.c.l.b16 %v57
    %v293 = vunpack.c.h.b16 %v57
    %v294 = vunpack.c.l.b16 %v58
    %v295 = vunpack.c.h.b16 %v58
    %v296 = vunpack.c.l.b16 %v59
    %v297 = vunpack.c.h.b16 %v59
    %v298 = vunpack.c.l.b16 %v60
    %v299 = vunpack.c.l.b16 %v61
    %v300 = vunpack.c.h.b16 %v61
    %v301 = vunpack.c.l.b16 %v62
    %v302 = vunpack.c.h.b16 %v62
    %v303 = vunpack.c.l.b16 %v63
    %v304 = vunpack.c.h.b16 %v63
    %v305 = vunpack.c.l.b16 %v64
    %v306 = vunpack.c.h.b16 %v64
    %v307 = vunpack.c.l.b16 %v65
    %v308 = vunpack.c.l.b16 %v66
    %v309 = vunpack.c.h.b16 %v66
    %v310 = vunpack.c.l.b16 %v67
    %v311 = vunpack.c.h.b16 %v67
    %v312 = vunpack.c.l.b16 %v68
    %v313 = vunpack.c.h.b16 %v68
    %v314 = vunpack.c.l.b16 %v69
    %v315 = vunpack.c.h.b16 %v69
    %v316 = vunpack.c.l.b16 %v70
    %v317 = vunpack.c.l.b16 %v71
    %v318 = vunpack.c.h.b16 %v71
    %v319 = vunpack.c.l.b16 %v72
    %v320 = vunpack.c.h.b16 %v72
    %v321 = vunpack.c.l.b16 %v73
    %v322 = vunpack.c.h.b16 %v73
    %v323 = vunpack.c.l.b16 %v74
    %v324 = vunpack.c.h.b16 %v74
    %v325 = vunpack.c.l.b16 %v75
    %v326 = vunpack.c.l.b16 %v76
    %v327 = vunpack.c.h.b16 %v76
    %v328 = vunpack.c.l.b16 %v77
    %v329 = vunpack.c.h.b16 %v77
    %v330 = vunpack.c.l.b16 %v78
    %v331 = vunpack.c.h.b16 %v78
    %v332 = vunpack.c.l.b16 %v79
    %v333 = vunpack.c.h.b16 %v79
    %v334 = vunpack.c.l.b16 %v80
    %v335 = vunpack.c.l.b16 %v81
    %v336 = vunpack.c.h.b16 %v81
    %v337 = vunpack.c.l.b16 %v82
    %v338 = vunpack.c.h.b16 %v82
    %v339 = vunpack.c.l.b16 %v83
    %v340 = vunpack.c.h.b16 %v83
    %v341 = vunpack.c.l.b16 %v84
    %v342 = vunpack.c.h.b16 %v84
    %v343 = vunpack.c.l.b16 %v85
    %v344 = vunpack.c.l.b16 %v86
    %v345 = vunpack.c.h.b16 %v86
    %v346 = vunpack.c.l.b16 %v87
    %v347 = vunpack.c.h.b16 %v87
    %v348 = vunpack.c.l.b16 %v88
    %v349 = vunpack.c.h.b16 %v88
    %v350 = vunpack.c.l.b16 %v89
    %v351 = vunpack.c.h.b16 %v89
    %v352 = vunpack.c.l.b16 %v90
    %v353 = vunpack.c.l.b16 %v91
    %v354 = vunpack.c.h.b16 %v91
    %v355 = vunpack.c.l.b16 %v92
    %v356 = vunpack.c.h.b16 %v92
    %v357 = vunpack.c.l.b16 %v93
    %v358 = vunpack.c.h.b16 %v93
    %v359 = vunpack.c.l.b16 %v94
    %v360 = vunpack.c.h.b16 %v94
    %v361 = vunpack.c.l.b16 %v95
    %v362 = vunpack.c.l.b16 %v96
    %v363 = vunpack.c.h.b16 %v96
    %v364 = vunpack.c.l.b16 %v97
    %v365 = vunpack.c.h.b16 %v97
    %v366 = vunpack.c.l.b16 %v98
    %v367 = vunpack.c.h.b16 %v98
    %v368 = vunpack.c.l.b16 %v99
    %v369 = vunpack.c.h.b16 %v99
    %v370 = vunpack.c.l.b16 %v100
    %v371 = vunpack.c.l.b16 %v101
    %v372 = vunpack.c.h.b16 %v101
    %v373 = vunpack.c.l.b16 %v102
    %v374 = vunpack.c.h.b16 %v102
    %v375 = vunpack.c.l.b16 %v103
    %v376 = vunpack.c.h.b16 %v103
    %v377 = vunpack.c.l.b16 %v104
    %v378 = vunpack.c.h.b16 %v104
    %v379 = vunpack.c.l.b16 %v105
    %v380 = vunpack.c.l.b16 %v106
    %v381 = vunpack.c.h.b16 %v106
    %v382 = vunpack.c.l.b16 %v107
    %v383 = vunpack.c.h.b16 %v107
    %v384 = vunpack.c.l.b16 %v108
    %v385 = vunpack.c.h.b16 %v108
    %v386 = vunpack.c.l.b16 %v109
    %v387 = vunpack.c.h.b16 %v109
    %v388 = vunpack.c.l.b16 %v110
    %v389 = vunpack.c.l.b16 %v111
    %v390 = vunpack.c.h.b16 %v111
    %v391 = vunpack.c.l.b16 %v112
    %v392 = vunpack.c.h.b16 %v112
    %v393 = vunpack.c.l.b16 %v113
    %v394 = vunpack.c.h.b16 %v113
    %v395 = vunpack.c.l.b16 %v114
    %v396 = vunpack.c.h.b16 %v114
    %v397 = vunpack.c.l.b16 %v115
    %v398 = vunpack.c.l.b16 %v116
    %v399 = vunpack.c.h.b16 %v116
    %v400 = vunpack.c.l.b16 %v117
    %v401 = vunpack.c.h.b16 %v117
    %v402 = vunpack.c.l.b16 %v118
    %v403 = vunpack.c.h.b16 %v118
    %v404 = vunpack.c.l.b16 %v119
    %v405 = vunpack.c.h.b16 %v119
    %v406 = vunpack.c.l.b16 %v120
    %v407 = vunpack.c.l.b16 %v121
    %v408 = vunpack.c.h.b16 %v121
    %v409 = vunpack.c.l.b16 %v122
    %v410 = vunpack.c.h.b16 %v122
    %v411 = vunpack.c.l.b16 %v123
    %v412 = vunpack.c.h.b16 %v123
    %v413 = vunpack.c.l.b16 %v124
    %v414 = vunpack.c.h.b16 %v124
    %v415 = vunpack.c.l.b16 %v125
    %v416 = vunpack.c.l.b16 %v126
    %v417 = vunpack.c.h.b16 %v126
    %v418 = vunpack.c.l.b16 %v127
    %v419 = vunpack.c.h.b16 %v127
    %v420 = vunpack.c.l.b16 %v128
    %v421 = vunpack.c.h.b16 %v128
    %v422 = vunpack.c.l.b16 %v129
    %v423 = vunpack.c.h.b16 %v129
    %v424 = vunpack.c.l.b16 %v130
    %v425 = vunpack.c.l.b16 %v131
    %v426 = vunpack.c.h.b16 %v131
    %v427 = vunpack.c.l.b16 %v132
    %v428 = vunpack.c.h.b16 %v132
    %v429 = vunpack.c.l.b16 %v133
    %v430 = vunpack.c.h.b16 %v133
    %v431 = vunpack.c.l.b16 %v134
    %v432 = vunpack.c.h.b16 %v134
    %v433 = vunpack.c.l.b16 %v135
    %v434 = vunpack.c.l.b16 %v136
    %v435 = vunpack.c.h.b16 %v136
    %v436 = vunpack.c.l.b16 %v137
    %v437 = vunpack.c.h.b16 %v137
    %v438 = vunpack.c.l.b16 %v138
    %v439 = vunpack.c.h.b16 %v138
    %v440 = vunpack.c.l.b16 %v139
    %v441 = vunpack.c.h.b16 %v139
    %v442 = vunpack.c.l.b16 %v140
    %v443 = vunpack.c.l.b16 %v141
    %v444 = vunpack.c.h.b16 %v141
    %v445 = vunpack.c.l.b16 %v142
    %v446 = vunpack.c.h.b16 %v142
    %v447 = vunpack.c.l.b16 %v143
    %v448 = vunpack.c.h.b16 %v143
    %v449 = vunpack.c.l.b16 %v144
    %v450 = vunpack.c.h.b16 %v144
    %v451 = vunpack.c.l.b16 %v145
    %v452 = vunpack.c.l.b16 %v146
    %v453 = vunpack.c.h.b16 %v146
    %v454 = vunpack.c.l.b16 %v147
    %v455 = vunpack.c.h.b16 %v147
    %v456 = vunpack.c.l.b16 %v148
    %v457 = vunpack.c.h.b16 %v148
    %v458 = vunpack.c.l.b16 %v149
    %v459 = vunpack.c.h.b16 %v149
    %v460 = vunpack.c.l.b16 %v150
    %v461 = vunpack.c.l.b16 %v151
    %v462 = vunpack.c.h.b16 %v151
    %v463 = vunpack.c.l.b16 %v152
    %v464 = vunpack.c.h.b16 %v152
    %v465 = vunpack.c.l.b16 %v153
    %v466 = vunpack.c.h.b16 %v153
    %v467 = vunpack.c.l.b16 %v154
    %v468 = vunpack.c.h.b16 %v154
    %v469 = vunpack.c.l.b16 %v155
    %v470 = vunpack.c.l.b16 %v156
    %v471 = vunpack.c.h.b16 %v156
    %v472 = vunpack.c.l.b16 %v157
    %v473 = vunpack.c.h.b16 %v157
    %v474 = vunpack.c.l.b16 %v158
    %v475 = vunpack.c.h.b16 %v158
    %v476 = vunpack.c.l.b16 %v159
    %v477 = vunpack.c.h.b16 %v159
    %v478 = vunpack.c.l.b16 %v160
    %v479 = vunpack.c.l.b16 %v161
    %v480 = vunpack.c.h.b16 %v161
    %v481 = vunpack.c.l.b16 %v162
    %v482 = vunpack.c.h.b16 %v162
    %v483 = vunpack.c.l.b16 %v163
    %v484 = vunpack.c.h.b16 %v163
    %v485 = vunpack.c.l.b16 %v164
    %v486 = vunpack.c.h.b16 %v164
    %v487 = vunpack.c.l.b16 %v165
    %v488 = vpack.c.b16 %v290, %v281
    %v489 = vpack.c.b16 %v291, %v282
    %v490 = vpack.c.b16 %v292, %v283
    %v491 = vpack.c.b16 %v293, %v284
    %v492 = vpack.c.b16 %v294, %v285
    %v493 = vpack.c.b16 %v295, %v286
    %v494 = vpack.c.b16 %v296, %v287
    %v495 = vpack.c.b16 %v297, %v288
    %v496 = vpack.c.b16 %v298, %v289
    %v497 = vpack.c.b16 %v308, %v299
    %v498 = vpack.c.b16 %v309, %v300
    %v499 = vpack.c.b16 %v310, %v301
    %v500 = vpack.c.b16 %v311, %v302
    %v501 = vpack.c.b16 %v312, %v303
    %v502 = vpack.c.b16 %v313, %v304
    %v503 = vpack.c.b16 %v314, %v305
    %v504 = vpack.c.b16 %v315, %v306
    %v505 = vpack.c.b16 %v316, %v307
    %v506 = vpack.c.b16 %v326, %v317
    %v507 = vpack.c.b16 %v327, %v318
    %v508 = vpack.c.b16 %v328, %v319
    %v509 = vpack.c.b16 %v329, %v320
    %v510 = vpack.c.b16 %v330, %v321
    %v511 = vpack.c.b16 %v331, %v322
    %v512 = vpack.c.b16 %v332, %v323
    %v513 = vpack.c.b16 %v333, %v324
    %v514 = vpack.c.b16 %v334, %v325
    %v515 = vpack.c.b16 %v344, %v335
    %v516 = vpack.c.b16 %v345, %v336
    %v517 = vpack.c.b16 %v346, %v337
    %v518 = vpack.c.b16 %v347, %v338
    %v519 = vpack.c.b16 %v348, %v339
    %v520 = vpack.c.b16 %v349, %v340
    %v521 = vpack.c.b16 %v350, %v341
    %v522 = vpack.c.b16 %v351, %v342
    %v523 = vpack.c.b16 %v352, %v343
    %v524 = vpack.c.b16 %v362, %v353
    %v525 = vpack.c.b16 %v363, %v354
    %v526 = vpack.c.b16 %v364, %v355
    %v527 = vpack.c.b16 %v365, %v356
    %v528 = vpack.c.b16 %v366, %v357
    %v529 = vpack.c.b16 %v367, %v358
    %v530 = vpack.c.b16 %v368, %v359
    %v531 = vpack.c.b16 %v369, %v360
    %v532 = vpack.c.b16 %v370, %v361
    %v533 = vpack.c.b16 %v380, %v371
    %v534 = vpack.c.b16 %v381, %v372
    %v535 = vpack.c.b16 %v382, %v373
    %v536 = vpack.c.b16 %v383, %v374
    %v537 = vpack.c.b16 %v384, %v375
    %v538 = vpack.c.b16 %v385, %v376
    %v539 = vpack.c.b16 %v386, %v377
    %v540 = vpack.c.b16 %v387, %v378
    %v541 = vpack.c.b16 %v388, %v379
    %v542 = vpack.c.b16 %v398, %v389
    %v543 = vpack.c.b16 %v399, %v390
    %v544 = vpack.c.b16 %v400, %v391
    %v545 = vpack.c.b16 %v401, %v392
    %v546 = vpack.c.b16 %v402, %v393
    %v547 = vpack.c.b16 %v403, %v394
    %v548 = vpack.c.b16 %v404, %v395
    %v549 = vpack.c.b16 %v405, %v396
    %v550 = vpack.c.b16 %v406, %v397
    %v551 = vpack.c.b16 %v416, %v407
    %v552 = vpack.c.b16 %v417, %v408
    %v553 = vpack.c.b16 %v418, %v409
    %v554 = vpack.c.b16 %v419, %v410
    %v555 = vpack.c.b16 %v420, %v411
    %v556 = vpack.c.b16 %v421, %v412
    %v557 = vpack.c.b16 %v422, %v413
    %v558 = vpack.c.b16 %v423, %v414
    %v559 = vpack.c.b16 %v424, %v415
    %v560 = vpack.c.b16 %v434, %v425
    %v561 = vpack.c.b16 %v435, %v426
    %v562 = vpack.c.b16 %v436, %v427
    %v563 = vpack.c.b16 %v437, %v428
    %v564 = vpack.c.b16 %v438, %v429
    %v565 = vpack.c.b16 %v439, %v430
    %v566 = vpack.c.b16 %v440, %v431
    %v567 = vpack.c.b16 %v441, %v432
    %v568 = vpack.c.b16 %v442, %v433
    %v569 = vpack.c.b16 %v452, %v443
    %v570 = vpack.c.b16 %v453, %v444
    %v571 = vpack.c.b16 %v454, %v445
    %v572 = vpack.c.b16 %v455, %v446
    %v573 = vpack.c.b16 %v456, %v447
    %v574 = vpack.c.b16 %v457, %v448
    %v575 = vpack.c.b16 %v458, %v449
    %v576 = vpack.c.b16 %v459, %v450
    %v577 = vpack.c.b16 %v460, %v451
    %v578 = vpack.c.b16 %v470, %v461
    %v579 = vpack.c.b16 %v471, %v462
    %v580 = vpack.c.b16 %v472, %v463
    %v581 = vpack.c.b16 %v473, %v464
    %v582 = vpack.c.b16 %v474, %v465
    %v583 = vpack.c.b16 %v475, %v466
    %v584 = vpack.c.b16 %v476, %v467
    %v585 = vpack.c.b16 %v477, %v468
    %v586 = vpack.c.b16 %v478, %v469
    %v587 = vpack.c.b16 %v479, %v479
    %v588 = vpack.c.b16 %v480, %v480
    %v589 = vpack.c.b16 %v481, %v481
    %v590 = vpack.c.b16 %v482, %v482
    %v591 = vpack.c.b16 %v483, %v483
    %v592 = vpack.c.b16 %v484, %v484
    %v593 = vpack.c.b16 %v485, %v485
    %v594 = vpack.c.b16 %v486, %v486
    %v595 = vpack.c.b16 %v487, %v487
    %vm695 = vcmask 424960
    %v697 = vsel %vm695, %v50, 0
    %vm699 = vcmask 1041408
    %v701 = vsel %vm699, %v587, 0
    %v704 = vsel %vm699, %v588, 0
    %v707 = vsel %vm699, %v589, 0
    %v710 = vsel %vm699, %v590, 0
    %v713 = vsel %vm699, %v591, 0
    %v716 = vsel %vm699, %v592, 0
    %v719 = vsel %vm699, %v593, 0
    %v722 = vsel %vm699, %v594, 0
    %v725 = vsel %vm699, %v595, 0
    %727 = vmatprep.subr.bf16.mxu0 %v552
    %728 = vmatpush1.bf16.msra.mxu0 %v551
    %729 = vmatprep.subr.bf16.mxu0 %v543
    %730 = vmatpush1.bf16.msra.mxu0 %v542
    %731 = vmatprep.subr.bf16.mxu0 %v534
    %732 = vmatpush1.bf16.msra.mxu0 %v533
    %733 = vmatprep.subr.bf16.mxu0 %v525
    %734 = vmatpush1.bf16.msra.mxu0 %v524
    %735 = vmatprep.subr.bf16.mxu0 %v516
    %736 = vmatpush1.bf16.msra.mxu0 %v515
    %737 = vmatprep.subr.bf16.mxu0 %v507
    %738 = vmatpush1.bf16.msra.mxu0 %v506
    %739 = vmatprep.subr.bf16.mxu0 %v498
    %740 = vmatpush1.bf16.msra.mxu0 %v497
    %741 = vmatprep.subr.bf16.mxu0 %v489
    %742 = vmatpush1.bf16.msra.mxu0 %v488
    %743 = vmatprep.subr.bf16.mxu0 0
    %744 = vmatpush2.bf16.msra.mxu0 0
    %745 = vmatprep.subr.bf16.mxu0 0
    %746 = vmatpush2.bf16.msra.mxu0 0
    %747 = vmatprep.subr.bf16.mxu0 0
    %748 = vmatpush2.bf16.msra.mxu0 0
    %749 = vmatprep.subr.bf16.mxu0 0
    %750 = vmatpush2.bf16.msra.mxu0 0
    %751 = vmatprep.subr.bf16.mxu0 %v704
    %752 = vmatpush2.bf16.msra.mxu0 %v701
    %753 = vmatprep.subr.bf16.mxu0 %v579
    %754 = vmatpush2.bf16.msra.mxu0 %v578
    %755 = vmatprep.subr.bf16.mxu0 %v570
    %756 = vmatpush2.bf16.msra.mxu0 %v569
    %757 = vmatprep.subr.bf16.mxu0 %v561
    %758 = vmatpush2.bf16.msra.mxu0 %v560
    %759 = vmatprep.mubr.bf16.mxu0 %v697
    %760 = vmatmul.mubr.bf16.gmra.mxu0 %v49
    %v761 = vpop.f32.mrf.mxu0
    %v762 = vadd.f32 0.0, %v761
    %v763 = vpop.f32.mrf.mxu0
    %v764 = vadd.f32 0.0, %v763
    %v765 = vpop.f32.mrf.mxu0
    %v766 = vpop.f32.mrf.mxu0
    %767 = vdwg.mxu0
    %768 = vmatprep.subr.bf16.mxu0 %v554
    %769 = vmatpush1.bf16.msra.mxu0 %v553
    %770 = vmatprep.subr.bf16.mxu0 %v545
    %771 = vmatpush1.bf16.msra.mxu0 %v544
    %772 = vmatprep.subr.bf16.mxu0 %v536
    %773 = vmatpush1.bf16.msra.mxu0 %v535
    %774 = vmatprep.subr.bf16.mxu0 %v527
    %775 = vmatpush1.bf16.msra.mxu0 %v526
    %776 = vmatprep.subr.bf16.mxu0 %v518
    %777 = vmatpush1.bf16.msra.mxu0 %v517
    %778 = vmatprep.subr.bf16.mxu0 %v509
    %779 = vmatpush1.bf16.msra.mxu0 %v508
    %780 = vmatprep.subr.bf16.mxu0 %v500
    %781 = vmatpush1.bf16.msra.mxu0 %v499
    %782 = vmatprep.subr.bf16.mxu0 %v491
    %783 = vmatpush1.bf16.msra.mxu0 %v490
    %784 = vmatprep.subr.bf16.mxu0 0
    %785 = vmatpush2.bf16.msra.mxu0 0
    %786 = vmatprep.subr.bf16.mxu0 0
    %787 = vmatpush2.bf16.msra.mxu0 0
    %788 = vmatprep.subr.bf16.mxu0 0
    %789 = vmatpush2.bf16.msra.mxu0 0
    %790 = vmatprep.subr.bf16.mxu0 0
    %791 = vmatpush2.bf16.msra.mxu0 0
    %792 = vmatprep.subr.bf16.mxu0 %v710
    %793 = vmatpush2.bf16.msra.mxu0 %v707
    %794 = vmatprep.subr.bf16.mxu0 %v581
    %795 = vmatpush2.bf16.msra.mxu0 %v580
    %796 = vmatprep.subr.bf16.mxu0 %v572
    %797 = vmatpush2.bf16.msra.mxu0 %v571
    %798 = vmatprep.subr.bf16.mxu0 %v563
    %799 = vmatpush2.bf16.msra.mxu0 %v562
    %800 = vmatprep.mubr.bf16.mxu0 %v697
    %801 = vmatmul.mubr.bf16.gmra.mxu0 %v49
    %v802 = vpop.f32.mrf.mxu0
    %v803 = vadd.f32 0.0, %v802
    %v804 = vpop.f32.mrf.mxu0
    %v805 = vadd.f32 0.0, %v804
    %v806 = vpop.f32.mrf.mxu0
    %v807 = vpop.f32.mrf.mxu0
    %808 = vdwg.mxu0
    %809 = vmatprep.subr.bf16.mxu0 %v556
    %810 = vmatpush1.bf16.msra.mxu0 %v555
    %811 = vmatprep.subr.bf16.mxu0 %v547
    %812 = vmatpush1.bf16.msra.mxu0 %v546
    %813 = vmatprep.subr.bf16.mxu0 %v538
    %814 = vmatpush1.bf16.msra.mxu0 %v537
    %815 = vmatprep.subr.bf16.mxu0 %v529
    %816 = vmatpush1.bf16.msra.mxu0 %v528
    %817 = vmatprep.subr.bf16.mxu0 %v520
    %818 = vmatpush1.bf16.msra.mxu0 %v519
    %819 = vmatprep.subr.bf16.mxu0 %v511
    %820 = vmatpush1.bf16.msra.mxu0 %v510
    %821 = vmatprep.subr.bf16.mxu0 %v502
    %822 = vmatpush1.bf16.msra.mxu0 %v501
    %823 = vmatprep.subr.bf16.mxu0 %v493
    %824 = vmatpush1.bf16.msra.mxu0 %v492
    %825 = vmatprep.subr.bf16.mxu0 0
    %826 = vmatpush2.bf16.msra.mxu0 0
    %827 = vmatprep.subr.bf16.mxu0 0
    %828 = vmatpush2.bf16.msra.mxu0 0
    %829 = vmatprep.subr.bf16.mxu0 0
    %830 = vmatpush2.bf16.msra.mxu0 0
    %831 = vmatprep.subr.bf16.mxu0 0
    %832 = vmatpush2.bf16.msra.mxu0 0
    %833 = vmatprep.subr.bf16.mxu0 %v716
    %834 = vmatpush2.bf16.msra.mxu0 %v713
    %835 = vmatprep.subr.bf16.mxu0 %v583
    %836 = vmatpush2.bf16.msra.mxu0 %v582
    %837 = vmatprep.subr.bf16.mxu0 %v574
    %838 = vmatpush2.bf16.msra.mxu0 %v573
    %839 = vmatprep.subr.bf16.mxu0 %v565
    %840 = vmatpush2.bf16.msra.mxu0 %v564
    %841 = vmatprep.mubr.bf16.mxu0 %v697
    %842 = vmatmul.mubr.bf16.gmra.mxu0 %v49
    %v843 = vpop.f32.mrf.mxu0
    %v844 = vadd.f32 0.0, %v843
    %v845 = vpop.f32.mrf.mxu0
    %v846 = vadd.f32 0.0, %v845
    %v847 = vpop.f32.mrf.mxu0
    %v848 = vpop.f32.mrf.mxu0
    %849 = vdwg.mxu0
    %850 = vmatprep.subr.bf16.mxu0 %v558
    %851 = vmatpush1.bf16.msra.mxu0 %v557
    %852 = vmatprep.subr.bf16.mxu0 %v549
    %853 = vmatpush1.bf16.msra.mxu0 %v548
    %854 = vmatprep.subr.bf16.mxu0 %v540
    %855 = vmatpush1.bf16.msra.mxu0 %v539
    %856 = vmatprep.subr.bf16.mxu0 %v531
    %857 = vmatpush1.bf16.msra.mxu0 %v530
    %858 = vmatprep.subr.bf16.mxu0 %v522
    %859 = vmatpush1.bf16.msra.mxu0 %v521
    %860 = vmatprep.subr.bf16.mxu0 %v513
    %861 = vmatpush1.bf16.msra.mxu0 %v512
    %862 = vmatprep.subr.bf16.mxu0 %v504
    %863 = vmatpush1.bf16.msra.mxu0 %v503
    %864 = vmatprep.subr.bf16.mxu0 %v495
    %865 = vmatpush1.bf16.msra.mxu0 %v494
    %866 = vmatprep.subr.bf16.mxu0 0
    %867 = vmatpush2.bf16.msra.mxu0 0
    %868 = vmatprep.subr.bf16.mxu0 0
    %869 = vmatpush2.bf16.msra.mxu0 0
    %870 = vmatprep.subr.bf16.mxu0 0
    %871 = vmatpush2.bf16.msra.mxu0 0
    %872 = vmatprep.subr.bf16.mxu0 0
    %873 = vmatpush2.bf16.msra.mxu0 0
    %874 = vmatprep.subr.bf16.mxu0 %v722
    %875 = vmatpush2.bf16.msra.mxu0 %v719
    %876 = vmatprep.subr.bf16.mxu0 %v585
    %877 = vmatpush2.bf16.msra.mxu0 %v584
    %878 = vmatprep.subr.bf16.mxu0 %v576
    %879 = vmatpush2.bf16.msra.mxu0 %v575
    %880 = vmatprep.subr.bf16.mxu0 %v567
    %881 = vmatpush2.bf16.msra.mxu0 %v566
    %882 = vmatprep.mubr.bf16.mxu0 %v697
    %883 = vmatmul.mubr.bf16.gmra.mxu0 %v49
    %v884 = vpop.f32.mrf.mxu0
    %v885 = vadd.f32 0.0, %v884
    %v886 = vpop.f32.mrf.mxu0
    %v887 = vadd.f32 0.0, %v886
    %v888 = vpop.f32.mrf.mxu0
    %v889 = vpop.f32.mrf.mxu0
    %890 = vdwg.mxu0
    %891 = vmatprep.subr.bf16.mxu0 0
    %892 = vmatpush1.bf16.msra.mxu0 %v559
    %893 = vmatprep.subr.bf16.mxu0 0
    %894 = vmatpush1.bf16.msra.mxu0 %v550
    %895 = vmatprep.subr.bf16.mxu0 0
    %896 = vmatpush1.bf16.msra.mxu0 %v541
    %897 = vmatprep.subr.bf16.mxu0 0
    %898 = vmatpush1.bf16.msra.mxu0 %v532
    %899 = vmatprep.subr.bf16.mxu0 0
    %900 = vmatpush1.bf16.msra.mxu0 %v523
    %901 = vmatprep.subr.bf16.mxu0 0
    %902 = vmatpush1.bf16.msra.mxu0 %v514
    %903 = vmatprep.subr.bf16.mxu0 0
    %904 = vmatpush1.bf16.msra.mxu0 %v505
    %905 = vmatprep.subr.bf16.mxu0 0
    %906 = vmatpush1.bf16.msra.mxu0 %v496
    %907 = vmatprep.subr.bf16.mxu0 0
    %908 = vmatpush2.bf16.msra.mxu0 0
    %909 = vmatprep.subr.bf16.mxu0 0
    %910 = vmatpush2.bf16.msra.mxu0 0
    %911 = vmatprep.subr.bf16.mxu0 0
    %912 = vmatpush2.bf16.msra.mxu0 0
    %913 = vmatprep.subr.bf16.mxu0 0
    %914 = vmatpush2.bf16.msra.mxu0 0
    %915 = vmatprep.subr.bf16.mxu0 0
    %916 = vmatpush2.bf16.msra.mxu0 %v725
    %917 = vmatprep.subr.bf16.mxu0 0
    %918 = vmatpush2.bf16.msra.mxu0 %v586
    %919 = vmatprep.subr.bf16.mxu0 0
    %920 = vmatpush2.bf16.msra.mxu0 %v577
    %921 = vmatprep.subr.bf16.mxu0 0
    %922 = vmatpush2.bf16.msra.mxu0 %v568
    %923 = vmatprep.mubr.bf16.mxu0 %v697
    %924 = vmatmul.mubr.bf16.gmra.mxu0 %v49
    %v925 = vpop.f32.mrf.mxu0
    %v926 = vadd.f32 0.0, %v925
    %v927 = vpop.f32.mrf.mxu0
    %v928 = vpop.f32.mrf.mxu0
    %v929 = vpop.f32.mrf.mxu0
    %930 = vdwg.mxu0
    %931 = vst [vmem:[#allocation2] sm:$0xff] 0.0
    %932 = vst [vmem:[#allocation2 + $0x8] sm:$0xff] 0.0
    %933 = vst [vmem:[#allocation2 + $0x10] sm:$0xff] 0.0
    %934 = vst [vmem:[#allocation2 + $0x18] sm:$0xff] 0.0
    %935 = vst [vmem:[#allocation2 + $0x20] sm:$0xff] 0.0
    %936 = vst [vmem:[#allocation2 + $0x28] sm:$0xff] 0.0
    %937 = vst [vmem:[#allocation2 + $0x30] sm:$0xff] 0.0
    %938 = vst [vmem:[#allocation2 + $0x38] sm:$0xff] 0.0
    %939 = vst [vmem:[#allocation2 + $0x40] sm:$0xff] 0.0
    %940 = vst [vmem:[#allocation2 + $0x48] sm:$0xff] 0.0
    %941 = vst [vmem:[#allocation2] sm:$0x3f] %v762
    %942 = vst [vmem:[#allocation2 + $0x8] sm:$0x3f] %v764
    %943 = vst [vmem:[#allocation2 + $0x10] sm:$0x3f] %v803
    %944 = vst [vmem:[#allocation2 + $0x18] sm:$0x3f] %v805
    %945 = vst [vmem:[#allocation2 + $0x20] sm:$0x3f] %v844
    %946 = vst [vmem:[#allocation2 + $0x28] sm:$0x3f] %v846
    %947 = vst [vmem:[#allocation2 + $0x30] sm:$0x3f] %v885
    %948 = vst [vmem:[#allocation2 + $0x38] sm:$0x3f] %v887
    %949 = vst [vmem:[#allocation2 + $0x40] sm:$0x3f] %v926
    %950 = vst [vmem:[#allocation2 + $0x48] sm:$0x1] 1.0
    %v951 = vld [vmem:[#allocation7 + $0xb0] sm:$0xff]
    %v952 = vld [vmem:[#allocation7 + $0xb8] sm:$0xff]
    %v953 = vld [vmem:[#allocation7 + $0xc0] sm:$0xff]
    %v954 = vld [vmem:[#allocation7 + $0xc8] sm:$0xff]
    %v955 = vld [vmem:[#allocation2] sm:$0xff]
    %v956 = vld [vmem:[#allocation2 + $0x8] sm:$0xff]
    %v957 = vld [vmem:[#allocation2 + $0x10] sm:$0xff]
    %v958 = vld [vmem:[#allocation2 + $0x18] sm:$0xff]
    %v959 = vld [vmem:[#allocation2 + $0x20] sm:$0xff]
    %v960 = vld [vmem:[#allocation2 + $0x28] sm:$0xff]
    %v961 = vld [vmem:[#allocation2 + $0x30] sm:$0xff]
    %v962 = vld [vmem:[#allocation2 + $0x38] sm:$0xff]
    %v963 = vld [vmem:[#allocation2 + $0x40] sm:$0xff]
    %v964 = vld [vmem:[#allocation2 + $0x48] sm:$0xff]
    %vm965 = vcmask 654336
    %v967 = vsel %vm965, %v951, 0
    %v970 = vsel %vm965, %v952, 0
    %v973 = vsel %vm965, %v953, 0
    %v976 = vsel %vm965, %v954, 0
    %978 = vmatprep.subr.mxu0 0.0
    %979 = vmatpush1.msra.mxu0 0.0
    %980 = vmatprep.subr.mxu0 0.0
    %981 = vmatpush1.msra.mxu0 0.0
    %982 = vmatprep.subr.mxu0 0.0
    %983 = vmatpush1.msra.mxu0 0.0
    %984 = vmatprep.subr.mxu0 0.0
    %985 = vmatpush1.msra.mxu0 0.0
    %986 = vmatprep.subr.mxu0 0.0
    %987 = vmatpush1.msra.mxu0 0.0
    %988 = vmatprep.subr.mxu0 0.0
    %989 = vmatpush1.msra.mxu0 0.0
    %990 = vmatprep.subr.mxu0 0.0
    %991 = vmatpush1.msra.mxu0 %v964
    %992 = vmatprep.subr.mxu0 0.0
    %993 = vmatpush1.msra.mxu0 %v963
    %994 = vmatprep.subr.mxu0 0.0
    %995 = vmatpush1.msra.mxu0 %v962
    %996 = vmatprep.subr.mxu0 0.0
    %997 = vmatpush1.msra.mxu0 %v961
    %998 = vmatprep.subr.mxu0 0.0
    %999 = vmatpush1.msra.mxu0 %v960
    %1000 = vmatprep.subr.mxu0 0.0
    %1001 = vmatpush1.msra.mxu0 %v959
    %1002 = vmatprep.subr.mxu0 0.0
    %1003 = vmatpush1.msra.mxu0 %v958
    %1004 = vmatprep.subr.mxu0 0.0
    %1005 = vmatpush1.msra.mxu0 %v957
    %1006 = vmatprep.subr.mxu0 0.0
    %1007 = vmatpush1.msra.mxu0 %v956
    %1008 = vmatprep.subr.mxu0 0.0
    %1009 = vmatpush1.msra.mxu0 %v955
    %1010 = vmatprep.subr.mxu0 0.0
    %1011 = vmatpush2.msra.mxu0 0.0
    %1012 = vmatprep.subr.mxu0 0.0
    %1013 = vmatpush2.msra.mxu0 0.0
    %1014 = vmatprep.subr.mxu0 0.0
    %1015 = vmatpush2.msra.mxu0 0.0
    %1016 = vmatprep.subr.mxu0 0.0
    %1017 = vmatpush2.msra.mxu0 0.0
    %1018 = vmatprep.subr.mxu0 0.0
    %1019 = vmatpush2.msra.mxu0 0.0
    %1020 = vmatprep.subr.mxu0 0.0
    %1021 = vmatpush2.msra.mxu0 0.0
    %1022 = vmatprep.subr.mxu0 0.0
    %1023 = vmatpush2.msra.mxu0 0.0
    %1024 = vmatprep.subr.mxu0 0.0
    %1025 = vmatpush2.msra.mxu0 0.0
    %1026 = vmatprep.subr.mxu0 0.0
    %1027 = vmatpush2.msra.mxu0 0.0
    %1028 = vmatprep.subr.mxu0 0.0
    %1029 = vmatpush2.msra.mxu0 0.0
    %1030 = vmatprep.subr.mxu0 0.0
    %1031 = vmatpush2.msra.mxu0 0.0
    %1032 = vmatprep.subr.mxu0 0.0
    %1033 = vmatpush2.msra.mxu0 0.0
    %1034 = vmatprep.subr.mxu0 0.0
    %1035 = vmatpush2.msra.mxu0 0.0
    %1036 = vmatprep.subr.mxu0 0.0
    %1037 = vmatpush2.msra.mxu0 0.0
    %1038 = vmatprep.subr.mxu0 0.0
    %1039 = vmatpush2.msra.mxu0 0.0
    %1040 = vmatprep.subr.mxu0 0.0
    %1041 = vmatpush2.msra.mxu0 0.0
    %1042 = vmatprep.mubr.f32.mxu0 0.0
    %1043 = vmatmul.mubr.f32.gmra.mxu0 %v967
    %v1044 = vpop.f32.mrf.mxu0
    %v1045 = vadd.f32 0.0, %v1044
    %v1046 = vpop.f32.mrf.mxu0
    %1047 = vmatprep.mubr.f32.mxu0 0.0
    %1048 = vmatmul.mubr.f32.gmra.mxu0 %v970
    %v1049 = vpop.f32.mrf.mxu0
    %v1050 = vadd.f32 0.0, %v1049
    %v1051 = vpop.f32.mrf.mxu0
    %1052 = vmatprep.mubr.f32.mxu0 0.0
    %1053 = vmatmul.mubr.f32.gmra.mxu0 %v973
    %v1054 = vpop.f32.mrf.mxu0
    %v1055 = vadd.f32 0.0, %v1054
    %v1056 = vpop.f32.mrf.mxu0
    %1057 = vmatprep.mubr.f32.mxu0 0.0
    %1058 = vmatmul.mubr.f32.gmra.mxu0 %v976
    %v1059 = vpop.f32.mrf.mxu0
    %v1060 = vadd.f32 0.0, %v1059
    %v1061 = vpop.f32.mrf.mxu0
    %1062 = vdwg.mxu0
    %v1063 = vmax.f32 %v1045, 0.0
    %v1064 = vmax.f32 %v1050, 0.0
    %v1065 = vmax.f32 %v1055, 0.0
    %v1066 = vmax.f32 %v1060, 0.0
    %v1067 = vld [vmem:[#allocation7] sm:$0xff]
    %v1068 = vld [vmem:[#allocation7 + $0x8] sm:$0xff]
    %v1069 = vld [vmem:[#allocation7 + $0x10] sm:$0xff]
    %v1070 = vld [vmem:[#allocation7 + $0x18] sm:$0xff]
    %v1071 = vld [vmem:[#allocation7 + $0x20] sm:$0xff]
    %v1072 = vld [vmem:[#allocation7 + $0x28] sm:$0xff]
    %v1073 = vld [vmem:[#allocation7 + $0x30] sm:$0xff]
    %v1074 = vld [vmem:[#allocation7 + $0x38] sm:$0xff]
    %v1075 = vld [vmem:[#allocation7 + $0x40] sm:$0xff]
    %v1076 = vld [vmem:[#allocation7 + $0x48] sm:$0xff]
    %v1077 = vld [vmem:[#allocation7 + $0x50] sm:$0xff]
    %v1078 = vld [vmem:[#allocation7 + $0x58] sm:$0xff]
    %v1079 = vld [vmem:[#allocation7 + $0x60] sm:$0xff]
    %v1080 = vld [vmem:[#allocation7 + $0x68] sm:$0xff]
    %v1081 = vld [vmem:[#allocation7 + $0x70] sm:$0xff]
    %v1082 = vld [vmem:[#allocation7 + $0x78] sm:$0xff]
    %1083 = vmatprep.subr.mxu0 0.0
    %1084 = vmatpush1.msra.mxu0 %v1082
    %1085 = vmatprep.subr.mxu0 0.0
    %1086 = vmatpush1.msra.mxu0 %v1081
    %1087 = vmatprep.subr.mxu0 0.0
    %1088 = vmatpush1.msra.mxu0 %v1080
    %1089 = vmatprep.subr.mxu0 0.0
    %1090 = vmatpush1.msra.mxu0 %v1079
    %1091 = vmatprep.subr.mxu0 0.0
    %1092 = vmatpush1.msra.mxu0 %v1078
    %1093 = vmatprep.subr.mxu0 0.0
    %1094 = vmatpush1.msra.mxu0 %v1077
    %1095 = vmatprep.subr.mxu0 0.0
    %1096 = vmatpush1.msra.mxu0 %v1076
    %1097 = vmatprep.subr.mxu0 0.0
    %1098 = vmatpush1.msra.mxu0 %v1075
    %1099 = vmatprep.subr.mxu0 0.0
    %1100 = vmatpush1.msra.mxu0 %v1074
    %1101 = vmatprep.subr.mxu0 0.0
    %1102 = vmatpush1.msra.mxu0 %v1073
    %1103 = vmatprep.subr.mxu0 0.0
    %1104 = vmatpush1.msra.mxu0 %v1072
    %1105 = vmatprep.subr.mxu0 0.0
    %1106 = vmatpush1.msra.mxu0 %v1071
    %1107 = vmatprep.subr.mxu0 0.0
    %1108 = vmatpush1.msra.mxu0 %v1070
    %1109 = vmatprep.subr.mxu0 0.0
    %1110 = vmatpush1.msra.mxu0 %v1069
    %1111 = vmatprep.subr.mxu0 0.0
    %1112 = vmatpush1.msra.mxu0 %v1068
    %1113 = vmatprep.subr.mxu0 0.0
    %1114 = vmatpush1.msra.mxu0 %v1067
    %1115 = vmatprep.subr.mxu0 0.0
    %1116 = vmatpush2.msra.mxu0 0.0
    %1117 = vmatprep.subr.mxu0 0.0
    %1118 = vmatpush2.msra.mxu0 0.0
    %1119 = vmatprep.subr.mxu0 0.0
    %1120 = vmatpush2.msra.mxu0 0.0
    %1121 = vmatprep.subr.mxu0 0.0
    %1122 = vmatpush2.msra.mxu0 0.0
    %1123 = vmatprep.subr.mxu0 0.0
    %1124 = vmatpush2.msra.mxu0 0.0
    %1125 = vmatprep.subr.mxu0 0.0
    %1126 = vmatpush2.msra.mxu0 0.0
    %1127 = vmatprep.subr.mxu0 0.0
    %1128 = vmatpush2.msra.mxu0 0.0
    %1129 = vmatprep.subr.mxu0 0.0
    %1130 = vmatpush2.msra.mxu0 0.0
    %1131 = vmatprep.subr.mxu0 0.0
    %1132 = vmatpush2.msra.mxu0 0.0
    %1133 = vmatprep.subr.mxu0 0.0
    %1134 = vmatpush2.msra.mxu0 0.0
    %1135 = vmatprep.subr.mxu0 0.0
    %1136 = vmatpush2.msra.mxu0 0.0
    %1137 = vmatprep.subr.mxu0 0.0
    %1138 = vmatpush2.msra.mxu0 0.0
    %1139 = vmatprep.subr.mxu0 0.0
    %1140 = vmatpush2.msra.mxu0 0.0
    %1141 = vmatprep.subr.mxu0 0.0
    %1142 = vmatpush2.msra.mxu0 0.0
    %1143 = vmatprep.subr.mxu0 0.0
    %1144 = vmatpush2.msra.mxu0 0.0
    %1145 = vmatprep.subr.mxu0 0.0
    %1146 = vmatpush2.msra.mxu0 0.0
    %1147 = vmatprep.mubr.f32.mxu0 0.0
    %1148 = vmatmul.mubr.f32.gmra.mxu0 %v1063
    %v1149 = vpop.f32.mrf.mxu0
    %v1150 = vadd.f32 0.0, %v1149
    %v1151 = vpop.f32.mrf.mxu0
    %1152 = vmatprep.mubr.f32.mxu0 0.0
    %1153 = vmatmul.mubr.f32.gmra.mxu0 %v1064
    %v1154 = vpop.f32.mrf.mxu0
    %v1155 = vadd.f32 0.0, %v1154
    %v1156 = vpop.f32.mrf.mxu0
    %1157 = vmatprep.mubr.f32.mxu0 0.0
    %1158 = vmatmul.mubr.f32.gmra.mxu0 %v1065
    %v1159 = vpop.f32.mrf.mxu0
    %v1160 = vadd.f32 0.0, %v1159
    %v1161 = vpop.f32.mrf.mxu0
    %1162 = vmatprep.mubr.f32.mxu0 0.0
    %1163 = vmatmul.mubr.f32.gmra.mxu0 %v1066
    %v1164 = vpop.f32.mrf.mxu0
    %v1165 = vadd.f32 0.0, %v1164
    %v1166 = vpop.f32.mrf.mxu0
    %1167 = vdwg.mxu0
    %1172 = vrot.lane.b32.xlu0 %v1150, 96
    %v1173 = vpop.permute.xlu0 %1172
    %1174 = vrot.lane.b32.xlu0 %v1155, 96
    %v1175 = vpop.permute.xlu0 %1174
    %1176 = vrot.lane.b32.xlu0 %v1160, 96
    %v1177 = vpop.permute.xlu0 %1176
    %1178 = vrot.lane.b32.xlu0 %v1165, 96
    %v1179 = vpop.permute.xlu0 %1178
    %v1184 = vmax.f32 %v1150, %v1173
    %v1185 = vmax.f32 %v1155, %v1175
    %v1186 = vmax.f32 %v1160, %v1177
    %v1187 = vmax.f32 %v1165, %v1179
    %1192 = vrot.lane.b32.xlu0 %v1184, 64
    %v1193 = vpop.permute.xlu0 %1192
    %1194 = vrot.lane.b32.xlu0 %v1185, 64
    %v1195 = vpop.permute.xlu0 %1194
    %1196 = vrot.lane.b32.xlu0 %v1186, 64
    %v1197 = vpop.permute.xlu0 %1196
    %1198 = vrot.lane.b32.xlu0 %v1187, 64
    %v1199 = vpop.permute.xlu0 %1198
    %v1204 = vmax.f32 %v1184, %v1193
    %v1205 = vmax.f32 %v1185, %v1195
    %v1206 = vmax.f32 %v1186, %v1197
    %v1207 = vmax.f32 %v1187, %v1199
    %v1208 = vld [vmem:[#allocation7 + $0x80] sm:$0xff]
    %v1209 = vld [vmem:[#allocation7 + $0x88] sm:$0xff]
    %v1210 = vld [vmem:[#allocation7 + $0x90] sm:$0xff]
    %v1211 = vld [vmem:[#allocation7 + $0x98] sm:$0xff]
    %vm1212 = vcmask 261120
    %v1214 = vsel %vm1212, %v1204, 0
    %v1217 = vsel %vm1212, %v1205, 0
    %v1220 = vsel %vm1212, %v1206, 0
    %v1223 = vsel %vm1212, %v1207, 0
    %1225 = vmatprep.subr.mxu0 0.0
    %1226 = vmatpush1.msra.mxu0 0.0
    %1227 = vmatprep.subr.mxu0 0.0
    %1228 = vmatpush1.msra.mxu0 0.0
    %1229 = vmatprep.subr.mxu0 0.0
    %1230 = vmatpush1.msra.mxu0 0.0
    %1231 = vmatprep.subr.mxu0 0.0
    %1232 = vmatpush1.msra.mxu0 0.0
    %1233 = vmatprep.subr.mxu0 0.0
    %1234 = vmatpush1.msra.mxu0 0.0
    %1235 = vmatprep.subr.mxu0 0.0
    %1236 = vmatpush1.msra.mxu0 0.0
    %1237 = vmatprep.subr.mxu0 0.0
    %1238 = vmatpush1.msra.mxu0 0.0
    %1239 = vmatprep.subr.mxu0 0.0
    %1240 = vmatpush1.msra.mxu0 0.0
    %1241 = vmatprep.subr.mxu0 0.0
    %1242 = vmatpush1.msra.mxu0 0.0
    %1243 = vmatprep.subr.mxu0 0.0
    %1244 = vmatpush1.msra.mxu0 0.0
    %1245 = vmatprep.subr.mxu0 0.0
    %1246 = vmatpush1.msra.mxu0 0.0
    %1247 = vmatprep.subr.mxu0 0.0
    %1248 = vmatpush1.msra.mxu0 0.0
    %1249 = vmatprep.subr.mxu0 0.0
    %1250 = vmatpush1.msra.mxu0 %v1211
    %1251 = vmatprep.subr.mxu0 0.0
    %1252 = vmatpush1.msra.mxu0 %v1210
    %1253 = vmatprep.subr.mxu0 0.0
    %1254 = vmatpush1.msra.mxu0 %v1209
    %1255 = vmatprep.subr.mxu0 0.0
    %1256 = vmatpush1.msra.mxu0 %v1208
    %1257 = vmatprep.subr.mxu0 0.0
    %1258 = vmatpush2.msra.mxu0 0.0
    %1259 = vmatprep.subr.mxu0 0.0
    %1260 = vmatpush2.msra.mxu0 0.0
    %1261 = vmatprep.subr.mxu0 0.0
    %1262 = vmatpush2.msra.mxu0 0.0
    %1263 = vmatprep.subr.mxu0 0.0
    %1264 = vmatpush2.msra.mxu0 0.0
    %1265 = vmatprep.subr.mxu0 0.0
    %1266 = vmatpush2.msra.mxu0 0.0
    %1267 = vmatprep.subr.mxu0 0.0
    %1268 = vmatpush2.msra.mxu0 0.0
    %1269 = vmatprep.subr.mxu0 0.0
    %1270 = vmatpush2.msra.mxu0 0.0
    %1271 = vmatprep.subr.mxu0 0.0
    %1272 = vmatpush2.msra.mxu0 0.0
    %1273 = vmatprep.subr.mxu0 0.0
    %1274 = vmatpush2.msra.mxu0 0.0
    %1275 = vmatprep.subr.mxu0 0.0
    %1276 = vmatpush2.msra.mxu0 0.0
    %1277 = vmatprep.subr.mxu0 0.0
    %1278 = vmatpush2.msra.mxu0 0.0
    %1279 = vmatprep.subr.mxu0 0.0
    %1280 = vmatpush2.msra.mxu0 0.0
    %1281 = vmatprep.subr.mxu0 0.0
    %1282 = vmatpush2.msra.mxu0 0.0
    %1283 = vmatprep.subr.mxu0 0.0
    %1284 = vmatpush2.msra.mxu0 0.0
    %1285 = vmatprep.subr.mxu0 0.0
    %1286 = vmatpush2.msra.mxu0 0.0
    %1287 = vmatprep.subr.mxu0 0.0
    %1288 = vmatpush2.msra.mxu0 0.0
    %1289 = vmatprep.mubr.f32.mxu0 0.0
    %1290 = vmatmul.mubr.f32.gmra.mxu0 %v1214
    %v1291 = vpop.f32.mrf.mxu0
    %v1292 = vadd.f32 0.0, %v1291
    %v1293 = vpop.f32.mrf.mxu0
    %1294 = vmatprep.mubr.f32.mxu0 0.0
    %1295 = vmatmul.mubr.f32.gmra.mxu0 %v1217
    %v1296 = vpop.f32.mrf.mxu0
    %v1297 = vadd.f32 0.0, %v1296
    %v1298 = vpop.f32.mrf.mxu0
    %1299 = vmatprep.mubr.f32.mxu0 0.0
    %1300 = vmatmul.mubr.f32.gmra.mxu0 %v1220
    %v1301 = vpop.f32.mrf.mxu0
    %v1302 = vadd.f32 0.0, %v1301
    %v1303 = vpop.f32.mrf.mxu0
    %1304 = vmatprep.mubr.f32.mxu0 0.0
    %1305 = vmatmul.mubr.f32.gmra.mxu0 %v1223
    %v1306 = vpop.f32.mrf.mxu0
    %v1307 = vadd.f32 0.0, %v1306
    %v1308 = vpop.f32.mrf.mxu0
    %1309 = vdwg.mxu0
    %vm1310 = vcmask 97280
    %1311 = vst.msk [vmem:[#allocation3] sm:$0xff] %vm1310, 0.0
    %1312 = vst.msk [vmem:[#allocation3 + $0x8] sm:$0xff] %vm1310, 0.0
    %1313 = vst.msk [vmem:[#allocation3 + $0x10] sm:$0xff] %vm1310, 0.0
    %1314 = vst.msk [vmem:[#allocation3 + $0x18] sm:$0xff] %vm1310, 0.0
    %1315 = vst.msk [vmem:[#allocation3 + $0x20] sm:$0xff] %vm1310, 0.0
    %1316 = vst.msk [vmem:[#allocation3 + $0x28] sm:$0xff] %vm1310, 0.0
    %1317 = vst.msk [vmem:[#allocation3 + $0x30] sm:$0xff] %vm1310, 0.0
    %1318 = vst.msk [vmem:[#allocation3 + $0x38] sm:$0xff] %vm1310, 0.0
    %1319 = vst.msk [vmem:[#allocation3 + $0x40] sm:$0xff] %vm1310, 0.0
    %1320 = vst.msk [vmem:[#allocation3 + $0x48] sm:$0xff] %vm1310, 0.0
    %1321 = vst.msk [vmem:[#allocation3 + $0x50] sm:$0xff] %vm1310, 0.0
    %1322 = vst.msk [vmem:[#allocation3 + $0x58] sm:$0xff] %vm1310, 0.0
    %1323 = vst.msk [vmem:[#allocation3 + $0x60] sm:$0xff] %vm1310, 0.0
    %1324 = vst.msk [vmem:[#allocation3 + $0x68] sm:$0xff] %vm1310, 0.0
    %1325 = vst.msk [vmem:[#allocation3 + $0x70] sm:$0xff] %vm1310, 0.0
    %1326 = vst.msk [vmem:[#allocation3 + $0x78] sm:$0xff] %vm1310, 0.0
    %1327 = vst.msk [vmem:[#allocation3 + $0x80] sm:$0xff] %vm1310, 0.0
    %1328 = vst.msk [vmem:[#allocation3 + $0x88] sm:$0xff] %vm1310, 0.0
    %1329 = vst.msk [vmem:[#allocation3 + $0x90] sm:$0xff] %vm1310, 0.0
    %1330 = vst.msk [vmem:[#allocation3 + $0x98] sm:$0xff] %vm1310, 0.0
    %1331 = vst.msk [vmem:[#allocation3 + $0xa0] sm:$0xff] %vm1310, 0.0
    %1332 = vst.msk [vmem:[#allocation3 + $0xa8] sm:$0xff] %vm1310, 0.0
    %1333 = vst.msk [vmem:[#allocation3 + $0xb0] sm:$0xff] %vm1310, 0.0
    %1334 = vst.msk [vmem:[#allocation3 + $0xb8] sm:$0xff] %vm1310, 0.0
    %1335 = vst.msk [vmem:[#allocation3 + $0xc0] sm:$0xff] %vm1310, 0.0
    %1336 = vst.msk [vmem:[#allocation3 + $0xc8] sm:$0xff] %vm1310, 0.0
    %1337 = vst.msk [vmem:[#allocation3 + $0xd0] sm:$0xff] %vm1310, 0.0
    %1338 = vst.msk [vmem:[#allocation3 + $0xd8] sm:$0xff] %vm1310, 0.0
    %1339 = vst.msk [vmem:[#allocation3 + $0xe0] sm:$0xff] %vm1310, 0.0
    %1340 = vst.msk [vmem:[#allocation3 + $0xe8] sm:$0xff] %vm1310, 0.0
    %1341 = vst.msk [vmem:[#allocation3 + $0xf0] sm:$0xff] %vm1310, 0.0
    %1342 = vst.msk [vmem:[#allocation3 + $0xf8] sm:$0xff] %vm1310, 0.0
    %1343 = vst.msk [vmem:[#allocation3 + $0x100] sm:$0xff] %vm1310, 0.0
    %1344 = vst.msk [vmem:[#allocation3 + $0x108] sm:$0xff] %vm1310, 0.0
    %1345 = vst.msk [vmem:[#allocation3 + $0x110] sm:$0xff] %vm1310, 0.0
    %1346 = vst.msk [vmem:[#allocation3 + $0x118] sm:$0xff] %vm1310, 0.0
    %1347 = vst.msk [vmem:[#allocation3 + $0x120] sm:$0xff] %vm1310, 0.0
    %1348 = vst.msk [vmem:[#allocation3] sm:$0xff] %vm1310, %v1292
    %1349 = vst.msk [vmem:[#allocation3 + $0x8] sm:$0xff] %vm1310, %v1297
    %1350 = vst.msk [vmem:[#allocation3 + $0x10] sm:$0xff] %vm1310, %v1302
    %1351 = vst.msk [vmem:[#allocation3 + $0x18] sm:$0xff] %vm1310, %v1307
    %1356 = vrot.lane.b32.xlu0 %v1292, 116
    %v1357 = vpop.permute.xlu0 %1356
    %1358 = vrot.lane.b32.xlu0 %v1297, 116
    %v1359 = vpop.permute.xlu0 %1358
    %1360 = vrot.lane.b32.xlu0 %v1302, 116
    %v1361 = vpop.permute.xlu0 %1360
    %1362 = vrot.lane.b32.xlu0 %v1307, 116
    %v1363 = vpop.permute.xlu0 %1362
    %1368 = vst.msk [vmem:[#allocation3 + $0x20] sm:$0xff] %vm1310, %v1357
    %1369 = vst.msk [vmem:[#allocation3 + $0x28] sm:$0xff] %vm1310, %v1359
    %1370 = vst.msk [vmem:[#allocation3 + $0x30] sm:$0xff] %vm1310, %v1361
    %1371 = vst.msk [vmem:[#allocation3 + $0x38] sm:$0xff] %vm1310, %v1363
    %1372 = vrot.lane.b32.xlu0 %v1292, 104
    %v1373 = vpop.permute.xlu0 %1372
    %1374 = vrot.lane.b32.xlu0 %v1297, 104
    %v1375 = vpop.permute.xlu0 %1374
    %1376 = vrot.lane.b32.xlu0 %v1302, 104
    %v1377 = vpop.permute.xlu0 %1376
    %1378 = vrot.lane.b32.xlu0 %v1307, 104
    %v1379 = vpop.permute.xlu0 %1378
    %1384 = vst.msk [vmem:[#allocation3 + $0x40] sm:$0xff] %vm1310, %v1373
    %1385 = vst.msk [vmem:[#allocation3 + $0x48] sm:$0xff] %vm1310, %v1375
    %1386 = vst.msk [vmem:[#allocation3 + $0x50] sm:$0xff] %vm1310, %v1377
    %1387 = vst.msk [vmem:[#allocation3 + $0x58] sm:$0xff] %vm1310, %v1379
    %1388 = vrot.lane.b32.xlu0 %v1292, 92
    %v1389 = vpop.permute.xlu0 %1388
    %1390 = vrot.lane.b32.xlu0 %v1297, 92
    %v1391 = vpop.permute.xlu0 %1390
    %1392 = vrot.lane.b32.xlu0 %v1302, 92
    %v1393 = vpop.permute.xlu0 %1392
    %1394 = vrot.lane.b32.xlu0 %v1307, 92
    %v1395 = vpop.permute.xlu0 %1394
    %1400 = vst.msk [vmem:[#allocation3 + $0x60] sm:$0xff] %vm1310, %v1389
    %1401 = vst.msk [vmem:[#allocation3 + $0x68] sm:$0xff] %vm1310, %v1391
    %1402 = vst.msk [vmem:[#allocation3 + $0x70] sm:$0xff] %vm1310, %v1393
    %1403 = vst.msk [vmem:[#allocation3 + $0x78] sm:$0xff] %vm1310, %v1395
    %1404 = vrot.lane.b32.xlu0 %v1292, 80
    %v1405 = vpop.permute.xlu0 %1404
    %1406 = vrot.lane.b32.xlu0 %v1297, 80
    %v1407 = vpop.permute.xlu0 %1406
    %1408 = vrot.lane.b32.xlu0 %v1302, 80
    %v1409 = vpop.permute.xlu0 %1408
    %1410 = vrot.lane.b32.xlu0 %v1307, 80
    %v1411 = vpop.permute.xlu0 %1410
    %1416 = vst.msk [vmem:[#allocation3 + $0x80] sm:$0xff] %vm1310, %v1405
    %1417 = vst.msk [vmem:[#allocation3 + $0x88] sm:$0xff] %vm1310, %v1407
    %1418 = vst.msk [vmem:[#allocation3 + $0x90] sm:$0xff] %vm1310, %v1409
    %1419 = vst.msk [vmem:[#allocation3 + $0x98] sm:$0xff] %vm1310, %v1411
    %1420 = vrot.lane.b32.xlu0 %v1292, 68
    %v1421 = vpop.permute.xlu0 %1420
    %1422 = vrot.lane.b32.xlu0 %v1297, 68
    %v1423 = vpop.permute.xlu0 %1422
    %1424 = vrot.lane.b32.xlu0 %v1302, 68
    %v1425 = vpop.permute.xlu0 %1424
    %1426 = vrot.lane.b32.xlu0 %v1307, 68
    %v1427 = vpop.permute.xlu0 %1426
    %1432 = vst.msk [vmem:[#allocation3 + $0xa0] sm:$0xff] %vm1310, %v1421
    %1433 = vst.msk [vmem:[#allocation3 + $0xa8] sm:$0xff] %vm1310, %v1423
    %1434 = vst.msk [vmem:[#allocation3 + $0xb0] sm:$0xff] %vm1310, %v1425
    %1435 = vst.msk [vmem:[#allocation3 + $0xb8] sm:$0xff] %vm1310, %v1427
    %1436 = vrot.lane.b32.xlu0 %v1292, 56
    %v1437 = vpop.permute.xlu0 %1436
    %1438 = vrot.lane.b32.xlu0 %v1297, 56
    %v1439 = vpop.permute.xlu0 %1438
    %1440 = vrot.lane.b32.xlu0 %v1302, 56
    %v1441 = vpop.permute.xlu0 %1440
    %1442 = vrot.lane.b32.xlu0 %v1307, 56
    %v1443 = vpop.permute.xlu0 %1442
    %1448 = vst.msk [vmem:[#allocation3 + $0xc0] sm:$0xff] %vm1310, %v1437
    %1449 = vst.msk [vmem:[#allocation3 + $0xc8] sm:$0xff] %vm1310, %v1439
    %1450 = vst.msk [vmem:[#allocation3 + $0xd0] sm:$0xff] %vm1310, %v1441
    %1451 = vst.msk [vmem:[#allocation3 + $0xd8] sm:$0xff] %vm1310, %v1443
    %1452 = vrot.lane.b32.xlu0 %v1292, 44
    %v1453 = vpop.permute.xlu0 %1452
    %1454 = vrot.lane.b32.xlu0 %v1297, 44
    %v1455 = vpop.permute.xlu0 %1454
    %1456 = vrot.lane.b32.xlu0 %v1302, 44
    %v1457 = vpop.permute.xlu0 %1456
    %1458 = vrot.lane.b32.xlu0 %v1307, 44
    %v1459 = vpop.permute.xlu0 %1458
    %1464 = vst.msk [vmem:[#allocation3 + $0xe0] sm:$0xff] %vm1310, %v1453
    %1465 = vst.msk [vmem:[#allocation3 + $0xe8] sm:$0xff] %vm1310, %v1455
    %1466 = vst.msk [vmem:[#allocation3 + $0xf0] sm:$0xff] %vm1310, %v1457
    %1467 = vst.msk [vmem:[#allocation3 + $0xf8] sm:$0xff] %vm1310, %v1459
    %1468 = vrot.lane.b32.xlu0 %v1292, 32
    %v1469 = vpop.permute.xlu0 %1468
    %1470 = vrot.lane.b32.xlu0 %v1297, 32
    %v1471 = vpop.permute.xlu0 %1470
    %1472 = vrot.lane.b32.xlu0 %v1302, 32
    %v1473 = vpop.permute.xlu0 %1472
    %1474 = vrot.lane.b32.xlu0 %v1307, 32
    %v1475 = vpop.permute.xlu0 %1474
    %1480 = vst.msk [vmem:[#allocation3 + $0x100] sm:$0xff] %vm1310, %v1469
    %1481 = vst.msk [vmem:[#allocation3 + $0x108] sm:$0xff] %vm1310, %v1471
    %1482 = vst.msk [vmem:[#allocation3 + $0x110] sm:$0xff] %vm1310, %v1473
    %1483 = vst.msk [vmem:[#allocation3 + $0x118] sm:$0xff] %vm1310, %v1475
    %vm1484 = vcmask 90112
    %1485 = vst.msk [vmem:[#allocation3 + $0x120] sm:$0x1] %vm1484, 1.0
    %v1486 = vld [vmem:[%s2] sm:$0xff]
    %v1487 = vld [vmem:[%s2 + $0x8] sm:$0xff]
    %v1488 = vld [vmem:[%s2 + $0x10] sm:$0xff]
    %v1489 = vld [vmem:[%s2 + $0x18] sm:$0xff]
    %v1490 = vld [vmem:[%s2 + $0x20] sm:$0xff]
    %v1491 = vld [vmem:[%s2 + $0x28] sm:$0xff]
    %v1492 = vld [vmem:[%s2 + $0x30] sm:$0xff]
    %v1493 = vld [vmem:[%s2 + $0x38] sm:$0xff]
    %v1494 = vld [vmem:[%s2 + $0x40] sm:$0xff]
    %v1495 = vld [vmem:[%s2 + $0x48] sm:$0xff]
    %v1496 = vld [vmem:[%s2 + $0x50] sm:$0xff]
    %v1497 = vld [vmem:[%s2 + $0x58] sm:$0xff]
    %v1498 = vld [vmem:[%s2 + $0x60] sm:$0xff]
    %v1499 = vld [vmem:[%s2 + $0x68] sm:$0xff]
    %v1500 = vld [vmem:[%s2 + $0x70] sm:$0xff]
    %v1501 = vld [vmem:[%s2 + $0x78] sm:$0xff]
    %v1502 = vld [vmem:[%s2 + $0x80] sm:$0xff]
    %v1503 = vld [vmem:[%s2 + $0x88] sm:$0xff]
    %v1504 = vld [vmem:[%s2 + $0x90] sm:$0xff]
    %v1505 = vld [vmem:[%s2 + $0x98] sm:$0xff]
    %v1506 = vld [vmem:[%s2 + $0xa0] sm:$0xff]
    %v1507 = vld [vmem:[%s2 + $0xa8] sm:$0xff]
    %v1508 = vld [vmem:[%s2 + $0xb0] sm:$0xff]
    %v1509 = vld [vmem:[%s2 + $0xb8] sm:$0xff]
    %v1510 = vld [vmem:[#allocation3] sm:$0xff]
    %v1511 = vld [vmem:[#allocation3 + $0x8] sm:$0xff]
    %v1512 = vld [vmem:[#allocation3 + $0x10] sm:$0xff]
    %v1513 = vld [vmem:[#allocation3 + $0x18] sm:$0xff]
    %v1514 = vld [vmem:[#allocation3 + $0x20] sm:$0xff]
    %v1515 = vld [vmem:[#allocation3 + $0x28] sm:$0xff]
    %v1516 = vld [vmem:[#allocation3 + $0x30] sm:$0xff]
    %v1517 = vld [vmem:[#allocation3 + $0x38] sm:$0xff]
    %v1518 = vld [vmem:[#allocation3 + $0x40] sm:$0xff]
    %v1519 = vld [vmem:[#allocation3 + $0x48] sm:$0xff]
    %v1520 = vld [vmem:[#allocation3 + $0x50] sm:$0xff]
    %v1521 = vld [vmem:[#allocation3 + $0x58] sm:$0xff]
    %v1522 = vld [vmem:[#allocation3 + $0x60] sm:$0xff]
    %v1523 = vld [vmem:[#allocation3 + $0x68] sm:$0xff]
    %v1524 = vld [vmem:[#allocation3 + $0x70] sm:$0xff]
    %v1525 = vld [vmem:[#allocation3 + $0x78] sm:$0xff]
    %v1526 = vld [vmem:[#allocation3 + $0x80] sm:$0xff]
    %v1527 = vld [vmem:[#allocation3 + $0x88] sm:$0xff]
    %v1528 = vld [vmem:[#allocation3 + $0x90] sm:$0xff]
    %v1529 = vld [vmem:[#allocation3 + $0x98] sm:$0xff]
    %v1530 = vld [vmem:[#allocation3 + $0xa0] sm:$0xff]
    %v1531 = vld [vmem:[#allocation3 + $0xa8] sm:$0xff]
    %v1532 = vld [vmem:[#allocation3 + $0xb0] sm:$0xff]
    %v1533 = vld [vmem:[#allocation3 + $0xb8] sm:$0xff]
    %v1534 = vld [vmem:[#allocation3 + $0xc0] sm:$0xff]
    %v1535 = vld [vmem:[#allocation3 + $0xc8] sm:$0xff]
    %v1536 = vld [vmem:[#allocation3 + $0xd0] sm:$0xff]
    %v1537 = vld [vmem:[#allocation3 + $0xd8] sm:$0xff]
    %v1538 = vld [vmem:[#allocation3 + $0xe0] sm:$0xff]
    %v1539 = vld [vmem:[#allocation3 + $0xe8] sm:$0xff]
    %v1540 = vld [vmem:[#allocation3 + $0xf0] sm:$0xff]
    %v1541 = vld [vmem:[#allocation3 + $0xf8] sm:$0xff]
    %v1542 = vld [vmem:[#allocation3 + $0x100] sm:$0xff]
    %v1543 = vld [vmem:[#allocation3 + $0x108] sm:$0xff]
    %v1544 = vld [vmem:[#allocation3 + $0x110] sm:$0xff]
    %v1545 = vld [vmem:[#allocation3 + $0x118] sm:$0xff]
    %v1546 = vld [vmem:[#allocation3 + $0x120] sm:$0xff]
    %vm1547 = vcmask 326656
    %v1549 = vsel %vm1547, %v1488, 0
    %v1552 = vsel %vm1547, %v1491, 0
    %v1555 = vsel %vm1547, %v1494, 0
    %v1558 = vsel %vm1547, %v1497, 0
    %v1561 = vsel %vm1547, %v1500, 0
    %v1564 = vsel %vm1547, %v1503, 0
    %v1567 = vsel %vm1547, %v1506, 0
    %v1570 = vsel %vm1547, %v1509, 0
    %1572 = vmatprep.subr.mxu0 0.0
    %1573 = vmatpush1.msra.mxu0 %v1525
    %1574 = vmatprep.subr.mxu0 0.0
    %1575 = vmatpush1.msra.mxu0 %v1524
    %1576 = vmatprep.subr.mxu0 0.0
    %1577 = vmatpush1.msra.mxu0 %v1523
    %1578 = vmatprep.subr.mxu0 0.0
    %1579 = vmatpush1.msra.mxu0 %v1522
    %1580 = vmatprep.subr.mxu0 0.0
    %1581 = vmatpush1.msra.mxu0 %v1521
    %1582 = vmatprep.subr.mxu0 0.0
    %1583 = vmatpush1.msra.mxu0 %v1520
    %1584 = vmatprep.subr.mxu0 0.0
    %1585 = vmatpush1.msra.mxu0 %v1519
    %1586 = vmatprep.subr.mxu0 0.0
    %1587 = vmatpush1.msra.mxu0 %v1518
    %1588 = vmatprep.subr.mxu0 0.0
    %1589 = vmatpush1.msra.mxu0 %v1517
    %1590 = vmatprep.subr.mxu0 0.0
    %1591 = vmatpush1.msra.mxu0 %v1516
    %1592 = vmatprep.subr.mxu0 0.0
    %1593 = vmatpush1.msra.mxu0 %v1515
    %1594 = vmatprep.subr.mxu0 0.0
    %1595 = vmatpush1.msra.mxu0 %v1514
    %1596 = vmatprep.subr.mxu0 0.0
    %1597 = vmatpush1.msra.mxu0 %v1513
    %1598 = vmatprep.subr.mxu0 0.0
    %1599 = vmatpush1.msra.mxu0 %v1512
    %1600 = vmatprep.subr.mxu0 0.0
    %1601 = vmatpush1.msra.mxu0 %v1511
    %1602 = vmatprep.subr.mxu0 0.0
    %1603 = vmatpush1.msra.mxu0 %v1510
    %1604 = vmatprep.subr.mxu0 0.0
    %1605 = vmatpush2.msra.mxu0 %v1541
    %1606 = vmatprep.subr.mxu0 0.0
    %1607 = vmatpush2.msra.mxu0 %v1540
    %1608 = vmatprep.subr.mxu0 0.0
    %1609 = vmatpush2.msra.mxu0 %v1539
    %1610 = vmatprep.subr.mxu0 0.0
    %1611 = vmatpush2.msra.mxu0 %v1538
    %1612 = vmatprep.subr.mxu0 0.0
    %1613 = vmatpush2.msra.mxu0 %v1537
    %1614 = vmatprep.subr.mxu0 0.0
    %1615 = vmatpush2.msra.mxu0 %v1536
    %1616 = vmatprep.subr.mxu0 0.0
    %1617 = vmatpush2.msra.mxu0 %v1535
    %1618 = vmatprep.subr.mxu0 0.0
    %1619 = vmatpush2.msra.mxu0 %v1534
    %1620 = vmatprep.subr.mxu0 0.0
    %1621 = vmatpush2.msra.mxu0 %v1533
    %1622 = vmatprep.subr.mxu0 0.0
    %1623 = vmatpush2.msra.mxu0 %v1532
    %1624 = vmatprep.subr.mxu0 0.0
    %1625 = vmatpush2.msra.mxu0 %v1531
    %1626 = vmatprep.subr.mxu0 0.0
    %1627 = vmatpush2.msra.mxu0 %v1530
    %1628 = vmatprep.subr.mxu0 0.0
    %1629 = vmatpush2.msra.mxu0 %v1529
    %1630 = vmatprep.subr.mxu0 0.0
    %1631 = vmatpush2.msra.mxu0 %v1528
    %1632 = vmatprep.subr.mxu0 0.0
    %1633 = vmatpush2.msra.mxu0 %v1527
    %1634 = vmatprep.subr.mxu0 0.0
    %1635 = vmatpush2.msra.mxu0 %v1526
    %1636 = vmatprep.mubr.f32.mxu0 %v1487
    %1637 = vmatmul.mubr.f32.gmra.mxu0 %v1486
    %v1638 = vpop.f32.mrf.mxu0
    %v1639 = vadd.f32 0.0, %v1638
    %v1640 = vpop.f32.mrf.mxu0
    %1641 = vmatprep.mubr.f32.mxu0 %v1490
    %1642 = vmatmul.mubr.f32.gmra.mxu0 %v1489
    %v1643 = vpop.f32.mrf.mxu0
    %v1644 = vadd.f32 0.0, %v1643
    %v1645 = vpop.f32.mrf.mxu0
    %1646 = vmatprep.mubr.f32.mxu0 %v1493
    %1647 = vmatmul.mubr.f32.gmra.mxu0 %v1492
    %v1648 = vpop.f32.mrf.mxu0
    %v1649 = vadd.f32 0.0, %v1648
    %v1650 = vpop.f32.mrf.mxu0
    %1651 = vmatprep.mubr.f32.mxu0 %v1496
    %1652 = vmatmul.mubr.f32.gmra.mxu0 %v1495
    %v1653 = vpop.f32.mrf.mxu0
    %v1654 = vadd.f32 0.0, %v1653
    %v1655 = vpop.f32.mrf.mxu0
    %1656 = vmatprep.mubr.f32.mxu0 %v1499
    %1657 = vmatmul.mubr.f32.gmra.mxu0 %v1498
    %v1658 = vpop.f32.mrf.mxu0
    %v1659 = vadd.f32 0.0, %v1658
    %v1660 = vpop.f32.mrf.mxu0
    %1661 = vmatprep.mubr.f32.mxu0 %v1502
    %1662 = vmatmul.mubr.f32.gmra.mxu0 %v1501
    %v1663 = vpop.f32.mrf.mxu0
    %v1664 = vadd.f32 0.0, %v1663
    %v1665 = vpop.f32.mrf.mxu0
    %1666 = vmatprep.mubr.f32.mxu0 %v1505
    %1667 = vmatmul.mubr.f32.gmra.mxu0 %v1504
    %v1668 = vpop.f32.mrf.mxu0
    %v1669 = vadd.f32 0.0, %v1668
    %v1670 = vpop.f32.mrf.mxu0
    %1671 = vmatprep.mubr.f32.mxu0 %v1508
    %1672 = vmatmul.mubr.f32.gmra.mxu0 %v1507
    %v1673 = vpop.f32.mrf.mxu0
    %v1674 = vadd.f32 0.0, %v1673
    %v1675 = vpop.f32.mrf.mxu0
    %1676 = vdwg.mxu0
    %1677 = vmatprep.subr.mxu0 0.0
    %1678 = vmatpush1.msra.mxu0 0.0
    %1679 = vmatprep.subr.mxu0 0.0
    %1680 = vmatpush1.msra.mxu0 0.0
    %1681 = vmatprep.subr.mxu0 0.0
    %1682 = vmatpush1.msra.mxu0 0.0
    %1683 = vmatprep.subr.mxu0 0.0
    %1684 = vmatpush1.msra.mxu0 0.0
    %1685 = vmatprep.subr.mxu0 0.0
    %1686 = vmatpush1.msra.mxu0 0.0
    %1687 = vmatprep.subr.mxu0 0.0
    %1688 = vmatpush1.msra.mxu0 0.0
    %1689 = vmatprep.subr.mxu0 0.0
    %1690 = vmatpush1.msra.mxu0 0.0
    %1691 = vmatprep.subr.mxu0 0.0
    %1692 = vmatpush1.msra.mxu0 0.0
    %1693 = vmatprep.subr.mxu0 0.0
    %1694 = vmatpush1.msra.mxu0 0.0
    %1695 = vmatprep.subr.mxu0 0.0
    %1696 = vmatpush1.msra.mxu0 0.0
    %1697 = vmatprep.subr.mxu0 0.0
    %1698 = vmatpush1.msra.mxu0 0.0
    %1699 = vmatprep.subr.mxu0 0.0
    %1700 = vmatpush1.msra.mxu0 %v1546
    %1701 = vmatprep.subr.mxu0 0.0
    %1702 = vmatpush1.msra.mxu0 %v1545
    %1703 = vmatprep.subr.mxu0 0.0
    %1704 = vmatpush1.msra.mxu0 %v1544
    %1705 = vmatprep.subr.mxu0 0.0
    %1706 = vmatpush1.msra.mxu0 %v1543
    %1707 = vmatprep.subr.mxu0 0.0
    %1708 = vmatpush1.msra.mxu0 %v1542
    %1709 = vmatprep.subr.mxu0 0.0
    %1710 = vmatpush2.msra.mxu0 0.0
    %1711 = vmatprep.subr.mxu0 0.0
    %1712 = vmatpush2.msra.mxu0 0.0
    %1713 = vmatprep.subr.mxu0 0.0
    %1714 = vmatpush2.msra.mxu0 0.0
    %1715 = vmatprep.subr.mxu0 0.0
    %1716 = vmatpush2.msra.mxu0 0.0
    %1717 = vmatprep.subr.mxu0 0.0
    %1718 = vmatpush2.msra.mxu0 0.0
    %1719 = vmatprep.subr.mxu0 0.0
    %1720 = vmatpush2.msra.mxu0 0.0
    %1721 = vmatprep.subr.mxu0 0.0
    %1722 = vmatpush2.msra.mxu0 0.0
    %1723 = vmatprep.subr.mxu0 0.0
    %1724 = vmatpush2.msra.mxu0 0.0
    %1725 = vmatprep.subr.mxu0 0.0
    %1726 = vmatpush2.msra.mxu0 0.0
    %1727 = vmatprep.subr.mxu0 0.0
    %1728 = vmatpush2.msra.mxu0 0.0
    %1729 = vmatprep.subr.mxu0 0.0
    %1730 = vmatpush2.msra.mxu0 0.0
    %1731 = vmatprep.subr.mxu0 0.0
    %1732 = vmatpush2.msra.mxu0 0.0
    %1733 = vmatprep.subr.mxu0 0.0
    %1734 = vmatpush2.msra.mxu0 0.0
    %1735 = vmatprep.subr.mxu0 0.0
    %1736 = vmatpush2.msra.mxu0 0.0
    %1737 = vmatprep.subr.mxu0 0.0
    %1738 = vmatpush2.msra.mxu0 0.0
    %1739 = vmatprep.subr.mxu0 0.0
    %1740 = vmatpush2.msra.mxu0 0.0
    %1741 = vmatprep.mubr.f32.mxu0 0.0
    %1742 = vmatmul.mubr.f32.gmra.mxu0 %v1549
    %v1743 = vpop.f32.mrf.mxu0
    %v1744 = vadd.f32 %v1639, %v1743
    %v1745 = vpop.f32.mrf.mxu0
    %1746 = vmatprep.mubr.f32.mxu0 0.0
    %1747 = vmatmul.mubr.f32.gmra.mxu0 %v1552
    %v1748 = vpop.f32.mrf.mxu0
    %v1749 = vadd.f32 %v1644, %v1748
    %v1750 = vpop.f32.mrf.mxu0
    %1751 = vmatprep.mubr.f32.mxu0 0.0
    %1752 = vmatmul.mubr.f32.gmra.mxu0 %v1555
    %v1753 = vpop.f32.mrf.mxu0
    %v1754 = vadd.f32 %v1649, %v1753
    %v1755 = vpop.f32.mrf.mxu0
    %1756 = vmatprep.mubr.f32.mxu0 0.0
    %1757 = vmatmul.mubr.f32.gmra.mxu0 %v1558
    %v1758 = vpop.f32.mrf.mxu0
    %v1759 = vadd.f32 %v1654, %v1758
    %v1760 = vpop.f32.mrf.mxu0
    %1761 = vmatprep.mubr.f32.mxu0 0.0
    %1762 = vmatmul.mubr.f32.gmra.mxu0 %v1561
    %v1763 = vpop.f32.mrf.mxu0
    %v1764 = vadd.f32 %v1659, %v1763
    %v1765 = vpop.f32.mrf.mxu0
    %1766 = vmatprep.mubr.f32.mxu0 0.0
    %1767 = vmatmul.mubr.f32.gmra.mxu0 %v1564
    %v1768 = vpop.f32.mrf.mxu0
    %v1769 = vadd.f32 %v1664, %v1768
    %v1770 = vpop.f32.mrf.mxu0
    %1771 = vmatprep.mubr.f32.mxu0 0.0
    %1772 = vmatmul.mubr.f32.gmra.mxu0 %v1567
    %v1773 = vpop.f32.mrf.mxu0
    %v1774 = vadd.f32 %v1669, %v1773
    %v1775 = vpop.f32.mrf.mxu0
    %1776 = vmatprep.mubr.f32.mxu0 0.0
    %1777 = vmatmul.mubr.f32.gmra.mxu0 %v1570
    %v1778 = vpop.f32.mrf.mxu0
    %v1779 = vadd.f32 %v1674, %v1778
    %v1780 = vpop.f32.mrf.mxu0
    %1781 = vdwg.mxu0
    %v1782 = vmax.f32 %v1744, 0.0
    %v1783 = vmax.f32 %v1749, 0.0
    %v1784 = vmax.f32 %v1754, 0.0
    %v1785 = vmax.f32 %v1759, 0.0
    %v1786 = vmax.f32 %v1764, 0.0
    %v1787 = vmax.f32 %v1769, 0.0
    %v1788 = vmax.f32 %v1774, 0.0
    %v1789 = vmax.f32 %v1779, 0.0
    %v1790 = vld [vmem:[#allocation7 + $0xa0] sm:$0xff]
    %v1791 = vld [vmem:[#allocation7 + $0xa8] sm:$0xf]
    %v1793 = vsel %vm1310, %v1782, 0
    %v1796 = vsel %vm1310, %v1783, 0
    %v1799 = vsel %vm1310, %v1784, 0
    %v1802 = vsel %vm1310, %v1785, 0
    %v1805 = vsel %vm1310, %v1786, 0
    %v1808 = vsel %vm1310, %v1787, 0
    %v1811 = vsel %vm1310, %v1788, 0
    %v1814 = vsel %vm1310, %v1789, 0
    %vm1816 = vcmask 1043456
    %v1818 = vsel %vm1816, %v1791, 0
    %1820 = vmatprep.subr.mxu0 0.0
    %1821 = vmatpush1.msra.mxu0 0.0
    %1822 = vmatprep.subr.mxu0 0.0
    %1823 = vmatpush1.msra.mxu0 0.0
    %1824 = vmatprep.subr.mxu0 0.0
    %1825 = vmatpush1.msra.mxu0 0.0
    %1826 = vmatprep.subr.mxu0 0.0
    %1827 = vmatpush1.msra.mxu0 0.0
    %1828 = vmatprep.subr.mxu0 0.0
    %1829 = vmatpush1.msra.mxu0 0.0
    %1830 = vmatprep.subr.mxu0 0.0
    %1831 = vmatpush1.msra.mxu0 0.0
    %1832 = vmatprep.subr.mxu0 0.0
    %1833 = vmatpush1.msra.mxu0 0.0
    %1834 = vmatprep.subr.mxu0 0.0
    %1835 = vmatpush1.msra.mxu0 0.0
    %1836 = vmatprep.subr.mxu0 0.0
    %1837 = vmatpush1.msra.mxu0 0.0
    %1838 = vmatprep.subr.mxu0 0.0
    %1839 = vmatpush1.msra.mxu0 0.0
    %1840 = vmatprep.subr.mxu0 0.0
    %1841 = vmatpush1.msra.mxu0 0.0
    %1842 = vmatprep.subr.mxu0 0.0
    %1843 = vmatpush1.msra.mxu0 0.0
    %1844 = vmatprep.subr.mxu0 0.0
    %1845 = vmatpush1.msra.mxu0 0.0
    %1846 = vmatprep.subr.mxu0 0.0
    %1847 = vmatpush1.msra.mxu0 0.0
    %1848 = vmatprep.subr.mxu0 0.0
    %1849 = vmatpush1.msra.mxu0 %v1818
    %1850 = vmatprep.subr.mxu0 0.0
    %1851 = vmatpush1.msra.mxu0 %v1790
    %1852 = vmatprep.subr.mxu0 0.0
    %1853 = vmatpush2.msra.mxu0 0.0
    %1854 = vmatprep.subr.mxu0 0.0
    %1855 = vmatpush2.msra.mxu0 0.0
    %1856 = vmatprep.subr.mxu0 0.0
    %1857 = vmatpush2.msra.mxu0 0.0
    %1858 = vmatprep.subr.mxu0 0.0
    %1859 = vmatpush2.msra.mxu0 0.0
    %1860 = vmatprep.subr.mxu0 0.0
    %1861 = vmatpush2.msra.mxu0 0.0
    %1862 = vmatprep.subr.mxu0 0.0
    %1863 = vmatpush2.msra.mxu0 0.0
    %1864 = vmatprep.subr.mxu0 0.0
    %1865 = vmatpush2.msra.mxu0 0.0
    %1866 = vmatprep.subr.mxu0 0.0
    %1867 = vmatpush2.msra.mxu0 0.0
    %1868 = vmatprep.subr.mxu0 0.0
    %1869 = vmatpush2.msra.mxu0 0.0
    %1870 = vmatprep.subr.mxu0 0.0
    %1871 = vmatpush2.msra.mxu0 0.0
    %1872 = vmatprep.subr.mxu0 0.0
    %1873 = vmatpush2.msra.mxu0 0.0
    %1874 = vmatprep.subr.mxu0 0.0
    %1875 = vmatpush2.msra.mxu0 0.0
    %1876 = vmatprep.subr.mxu0 0.0
    %1877 = vmatpush2.msra.mxu0 0.0
    %1878 = vmatprep.subr.mxu0 0.0
    %1879 = vmatpush2.msra.mxu0 0.0
    %1880 = vmatprep.subr.mxu0 0.0
    %1881 = vmatpush2.msra.mxu0 0.0
    %1882 = vmatprep.subr.mxu0 0.0
    %1883 = vmatpush2.msra.mxu0 0.0
    %1884 = vmatprep.mubr.f32.mxu0 0.0
    %1885 = vmatmul.mubr.f32.gmra.mxu0 %v1793
    %v1886 = vpop.f32.mrf.mxu0
    %v1887 = vadd.f32 0.0, %v1886
    %v1888 = vpop.f32.mrf.mxu0
    %1889 = vmatprep.mubr.f32.mxu0 0.0
    %1890 = vmatmul.mubr.f32.gmra.mxu0 %v1796
    %v1891 = vpop.f32.mrf.mxu0
    %v1892 = vadd.f32 0.0, %v1891
    %v1893 = vpop.f32.mrf.mxu0
    %1894 = vmatprep.mubr.f32.mxu0 0.0
    %1895 = vmatmul.mubr.f32.gmra.mxu0 %v1799
    %v1896 = vpop.f32.mrf.mxu0
    %v1897 = vadd.f32 0.0, %v1896
    %v1898 = vpop.f32.mrf.mxu0
    %1899 = vmatprep.mubr.f32.mxu0 0.0
    %1900 = vmatmul.mubr.f32.gmra.mxu0 %v1802
    %v1901 = vpop.f32.mrf.mxu0
    %v1902 = vadd.f32 0.0, %v1901
    %v1903 = vpop.f32.mrf.mxu0
    %1904 = vmatprep.mubr.f32.mxu0 0.0
    %1905 = vmatmul.mubr.f32.gmra.mxu0 %v1805
    %v1906 = vpop.f32.mrf.mxu0
    %v1907 = vadd.f32 0.0, %v1906
    %v1908 = vpop.f32.mrf.mxu0
    %1909 = vmatprep.mubr.f32.mxu0 0.0
    %1910 = vmatmul.mubr.f32.gmra.mxu0 %v1808
    %v1911 = vpop.f32.mrf.mxu0
    %v1912 = vadd.f32 0.0, %v1911
    %v1913 = vpop.f32.mrf.mxu0
    %1914 = vmatprep.mubr.f32.mxu0 0.0
    %1915 = vmatmul.mubr.f32.gmra.mxu0 %v1811
    %v1916 = vpop.f32.mrf.mxu0
    %v1917 = vadd.f32 0.0, %v1916
    %v1918 = vpop.f32.mrf.mxu0
    %1919 = vmatprep.mubr.f32.mxu0 0.0
    %1920 = vmatmul.mubr.f32.gmra.mxu0 %v1814
    %v1921 = vpop.f32.mrf.mxu0
    %v1922 = vadd.f32 0.0, %v1921
    %v1923 = vpop.f32.mrf.mxu0
    %1924 = vdwg.mxu0
    %1933 = vrot.lane.b32.xlu0 %v1887, 120
    %v1934 = vpop.permute.xlu0 %1933
    %1935 = vrot.lane.b32.xlu0 %v1892, 120
    %v1936 = vpop.permute.xlu0 %1935
    %1937 = vrot.lane.b32.xlu0 %v1897, 120
    %v1938 = vpop.permute.xlu0 %1937
    %1939 = vrot.lane.b32.xlu0 %v1902, 120
    %v1940 = vpop.permute.xlu0 %1939
    %1941 = vrot.lane.b32.xlu0 %v1907, 120
    %v1942 = vpop.permute.xlu0 %1941
    %1943 = vrot.lane.b32.xlu0 %v1912, 120
    %v1944 = vpop.permute.xlu0 %1943
    %1945 = vrot.lane.b32.xlu0 %v1917, 120
    %v1946 = vpop.permute.xlu0 %1945
    %1947 = vrot.lane.b32.xlu0 %v1922, 120
    %v1948 = vpop.permute.xlu0 %1947
    %v1957 = vmax.f32 %v1887, %v1934
    %v1958 = vmax.f32 %v1892, %v1936
    %v1959 = vmax.f32 %v1897, %v1938
    %v1960 = vmax.f32 %v1902, %v1940
    %v1961 = vmax.f32 %v1907, %v1942
    %v1962 = vmax.f32 %v1912, %v1944
    %v1963 = vmax.f32 %v1917, %v1946
    %v1964 = vmax.f32 %v1922, %v1948
    %1973 = vrot.lane.b32.xlu0 %v1957, 112
    %v1974 = vpop.permute.xlu0 %1973
    %1975 = vrot.lane.b32.xlu0 %v1958, 112
    %v1976 = vpop.permute.xlu0 %1975
    %1977 = vrot.lane.b32.xlu0 %v1959, 112
    %v1978 = vpop.permute.xlu0 %1977
    %1979 = vrot.lane.b32.xlu0 %v1960, 112
    %v1980 = vpop.permute.xlu0 %1979
    %1981 = vrot.lane.b32.xlu0 %v1961, 112
    %v1982 = vpop.permute.xlu0 %1981
    %1983 = vrot.lane.b32.xlu0 %v1962, 112
    %v1984 = vpop.permute.xlu0 %1983
    %1985 = vrot.lane.b32.xlu0 %v1963, 112
    %v1986 = vpop.permute.xlu0 %1985
    %1987 = vrot.lane.b32.xlu0 %v1964, 112
    %v1988 = vpop.permute.xlu0 %1987
    %v1997 = vmax.f32 %v1957, %v1974
    %v1998 = vmax.f32 %v1958, %v1976
    %v1999 = vmax.f32 %v1959, %v1978
    %v2000 = vmax.f32 %v1960, %v1980
    %v2001 = vmax.f32 %v1961, %v1982
    %v2002 = vmax.f32 %v1962, %v1984
    %v2003 = vmax.f32 %v1963, %v1986
    %v2004 = vmax.f32 %v1964, %v1988
    %v2005 = vld [vmem:[#allocation7 + $0x190] sm:$0x1]
    %v2006 = vld [vmem:[#allocation7 + $0xd0] sm:$0xff]
    %v2007 = vld [vmem:[#allocation7 + $0xd8] sm:$0xff]
    %v2008 = vld [vmem:[#allocation7 + $0xe0] sm:$0xff]
    %v2009 = vld [vmem:[#allocation7 + $0xe8] sm:$0xff]
    %v2010 = vld [vmem:[#allocation7 + $0xf0] sm:$0xff]
    %v2011 = vld [vmem:[#allocation7 + $0xf8] sm:$0xff]
    %v2012 = vld [vmem:[#allocation7 + $0x100] sm:$0xff]
    %v2013 = vld [vmem:[#allocation7 + $0x108] sm:$0xff]
    %2015 = vset.pattern.permute.xlu0 0
    %2016 = vperm.xlu0 %2015, %v1997
    %v2017 = vpop.permute.xlu0 %2016
    %2020 = vset.pattern.permute.xlu0 0
    %2021 = vperm.xlu0 %2020, %v1998
    %v2022 = vpop.permute.xlu0 %2021
    %2025 = vset.pattern.permute.xlu0 0
    %2026 = vperm.xlu0 %2025, %v1999
    %v2027 = vpop.permute.xlu0 %2026
    %2030 = vset.pattern.permute.xlu0 0
    %2031 = vperm.xlu0 %2030, %v2000
    %v2032 = vpop.permute.xlu0 %2031
    %2035 = vset.pattern.permute.xlu0 0
    %2036 = vperm.xlu0 %2035, %v2001
    %v2037 = vpop.permute.xlu0 %2036
    %2040 = vset.pattern.permute.xlu0 0
    %2041 = vperm.xlu0 %2040, %v2002
    %v2042 = vpop.permute.xlu0 %2041
    %2045 = vset.pattern.permute.xlu0 0
    %2046 = vperm.xlu0 %2045, %v2003
    %v2047 = vpop.permute.xlu0 %2046
    %2050 = vset.pattern.permute.xlu0 0
    %2051 = vperm.xlu0 %2050, %v2004
    %v2052 = vpop.permute.xlu0 %2051
    %v2054 = vmul.f32 %v2017, %v2006
    %v2055 = vmul.f32 %v2022, %v2007
    %v2056 = vmul.f32 %v2027, %v2008
    %v2057 = vmul.f32 %v2032, %v2009
    %v2058 = vmul.f32 %v2037, %v2010
    %v2059 = vmul.f32 %v2042, %v2011
    %v2060 = vmul.f32 %v2047, %v2012
    %v2061 = vmul.f32 %v2052, %v2013
    %v2062 = vadd.f32 %v2054, %v2055
    %v2063 = vadd.f32 %v2062, %v2056
    %v2064 = vadd.f32 %v2063, %v2057
    %v2065 = vadd.f32 %v2064, %v2058
    %v2066 = vadd.f32 %v2065, %v2059
    %v2067 = vadd.f32 %v2066, %v2060
    %v2068 = vadd.f32 %v2067, %v2061
    %v2069 = vrot.slane %v2068, 4
    %v2070 = vadd.f32 %v2068, %v2069
    %v2071 = vrot.slane %v2070, 2
    %v2072 = vadd.f32 %v2070, %v2071
    %v2073 = vrot.slane %v2072, 1
    %v2074 = vadd.f32 %v2072, %v2073
    %v2075 = vadd.f32 %v2005, %v2074
    %v2076 = vld [vmem:[#allocation7 + $0x110] sm:$0xff]
    %v2077 = vld [vmem:[#allocation7 + $0x118] sm:$0xff]
    %v2078 = vld [vmem:[#allocation7 + $0x120] sm:$0xff]
    %v2079 = vld [vmem:[#allocation7 + $0x128] sm:$0xff]
    %v2080 = vld [vmem:[#allocation7 + $0x130] sm:$0xff]
    %v2081 = vld [vmem:[#allocation7 + $0x138] sm:$0xff]
    %v2082 = vld [vmem:[#allocation7 + $0x140] sm:$0xff]
    %v2083 = vld [vmem:[#allocation7 + $0x148] sm:$0xff]
    %2084 = vset.pattern.permute.xlu0 1
    %2085 = vperm.xlu0 %2084, %v1997
    %v2086 = vpop.permute.xlu0 %2085
    %2088 = vset.pattern.permute.xlu0 1
    %2089 = vperm.xlu0 %2088, %v1998
    %v2090 = vpop.permute.xlu0 %2089
    %2092 = vset.pattern.permute.xlu0 1
    %2093 = vperm.xlu0 %2092, %v1999
    %v2094 = vpop.permute.xlu0 %2093
    %2096 = vset.pattern.permute.xlu0 1
    %2097 = vperm.xlu0 %2096, %v2000
    %v2098 = vpop.permute.xlu0 %2097
    %2100 = vset.pattern.permute.xlu0 1
    %2101 = vperm.xlu0 %2100, %v2001
    %v2102 = vpop.permute.xlu0 %2101
    %2104 = vset.pattern.permute.xlu0 1
    %2105 = vperm.xlu0 %2104, %v2002
    %v2106 = vpop.permute.xlu0 %2105
    %2108 = vset.pattern.permute.xlu0 1
    %2109 = vperm.xlu0 %2108, %v2003
    %v2110 = vpop.permute.xlu0 %2109
    %2112 = vset.pattern.permute.xlu0 1
    %2113 = vperm.xlu0 %2112, %v2004
    %v2114 = vpop.permute.xlu0 %2113
    %v2116 = vmul.f32 %v2086, %v2076
    %v2117 = vmul.f32 %v2090, %v2077
    %v2118 = vmul.f32 %v2094, %v2078
    %v2119 = vmul.f32 %v2098, %v2079
    %v2120 = vmul.f32 %v2102, %v2080
    %v2121 = vmul.f32 %v2106, %v2081
    %v2122 = vmul.f32 %v2110, %v2082
    %v2123 = vmul.f32 %v2114, %v2083
    %v2124 = vadd.f32 %v2116, %v2117
    %v2125 = vadd.f32 %v2124, %v2118
    %v2126 = vadd.f32 %v2125, %v2119
    %v2127 = vadd.f32 %v2126, %v2120
    %v2128 = vadd.f32 %v2127, %v2121
    %v2129 = vadd.f32 %v2128, %v2122
    %v2130 = vadd.f32 %v2129, %v2123
    %v2131 = vrot.slane %v2130, 4
    %v2132 = vadd.f32 %v2130, %v2131
    %v2133 = vrot.slane %v2132, 2
    %v2134 = vadd.f32 %v2132, %v2133
    %v2135 = vrot.slane %v2134, 1
    %v2136 = vadd.f32 %v2134, %v2135
    %v2137 = vadd.f32 %v2075, %v2136
    %v2138 = vld [vmem:[#allocation7 + $0x150] sm:$0xff]
    %v2139 = vld [vmem:[#allocation7 + $0x158] sm:$0xff]
    %v2140 = vld [vmem:[#allocation7 + $0x160] sm:$0xff]
    %v2141 = vld [vmem:[#allocation7 + $0x168] sm:$0xff]
    %v2142 = vld [vmem:[#allocation7 + $0x170] sm:$0xff]
    %v2143 = vld [vmem:[#allocation7 + $0x178] sm:$0xff]
    %v2144 = vld [vmem:[#allocation7 + $0x180] sm:$0xff]
    %v2145 = vld [vmem:[#allocation7 + $0x188] sm:$0xff]
    %2146 = vset.pattern.permute.xlu0 2
    %2147 = vperm.xlu0 %2146, %v1997
    %v2148 = vpop.permute.xlu0 %2147
    %2150 = vset.pattern.permute.xlu0 2
    %2151 = vperm.xlu0 %2150, %v1998
    %v2152 = vpop.permute.xlu0 %2151
    %2154 = vset.pattern.permute.xlu0 2
    %2155 = vperm.xlu0 %2154, %v1999
    %v2156 = vpop.permute.xlu0 %2155
    %2158 = vset.pattern.permute.xlu0 2
    %2159 = vperm.xlu0 %2158, %v2000
    %v2160 = vpop.permute.xlu0 %2159
    %2162 = vset.pattern.permute.xlu0 2
    %2163 = vperm.xlu0 %2162, %v2001
    %v2164 = vpop.permute.xlu0 %2163
    %2166 = vset.pattern.permute.xlu0 2
    %2167 = vperm.xlu0 %2166, %v2002
    %v2168 = vpop.permute.xlu0 %2167
    %2170 = vset.pattern.permute.xlu0 2
    %2171 = vperm.xlu0 %2170, %v2003
    %v2172 = vpop.permute.xlu0 %2171
    %2174 = vset.pattern.permute.xlu0 2
    %2175 = vperm.xlu0 %2174, %v2004
    %v2176 = vpop.permute.xlu0 %2175
    %v2178 = vmul.f32 %v2148, %v2138
    %v2179 = vmul.f32 %v2152, %v2139
    %v2180 = vmul.f32 %v2156, %v2140
    %v2181 = vmul.f32 %v2160, %v2141
    %v2182 = vmul.f32 %v2164, %v2142
    %v2183 = vmul.f32 %v2168, %v2143
    %v2184 = vmul.f32 %v2172, %v2144
    %v2185 = vmul.f32 %v2176, %v2145
    %v2186 = vadd.f32 %v2178, %v2179
    %v2187 = vadd.f32 %v2186, %v2180
    %v2188 = vadd.f32 %v2187, %v2181
    %v2189 = vadd.f32 %v2188, %v2182
    %v2190 = vadd.f32 %v2189, %v2183
    %v2191 = vadd.f32 %v2190, %v2184
    %v2192 = vadd.f32 %v2191, %v2185
    %v2193 = vrot.slane %v2192, 4
    %v2194 = vadd.f32 %v2192, %v2193
    %v2195 = vrot.slane %v2194, 2
    %v2196 = vadd.f32 %v2194, %v2195
    %v2197 = vrot.slane %v2196, 1
    %v2198 = vadd.f32 %v2196, %v2197
    %v2199 = vadd.f32 %v2137, %v2198
    %v2200 = vmax.f32 %v2199, 0.0
    %v2201 = vld [vmem:[#allocation7 + $0x198] sm:$0xff]
    %v2202 = vld [vmem:[#allocation7 + $0x1a0] sm:$0xff]
    %v2203 = vld [vmem:[#allocation7 + $0x1a8] sm:$0xff]
    %v2204 = vld [vmem:[#allocation7 + $0x1b0] sm:$0xff]
    %v2205 = vld [vmem:[#allocation7 + $0x1b8] sm:$0xff]
    %v2206 = vld [vmem:[#allocation7 + $0x1c0] sm:$0xff]
    %v2207 = vld [vmem:[#allocation7 + $0x1c8] sm:$0xff]
    %v2208 = vld [vmem:[#allocation7 + $0x1d0] sm:$0xff]
    %v2209 = vld [vmem:[#allocation7 + $0x1d8] sm:$0xff]
    %v2210 = vld [vmem:[#allocation7 + $0x1e0] sm:$0xff]
    %v2211 = vld [vmem:[#allocation7 + $0x1e8] sm:$0xff]
    %v2212 = vld [vmem:[#allocation7 + $0x1f0] sm:$0xff]
    %v2213 = vld [vmem:[#allocation7 + $0x1f8] sm:$0xff]
    %v2214 = vld [vmem:[#allocation7 + $0x200] sm:$0xff]
    %v2215 = vld [vmem:[#allocation7 + $0x208] sm:$0xff]
    %v2216 = vld [vmem:[#allocation7 + $0x210] sm:$0xff]
    %v2217 = vld [vmem:[#allocation7 + $0x218] sm:$0x1]
    %2218 = vmatprep.subr.mxu0 0.0
    %2219 = vmatpush1.msra.mxu0 %v2216
    %2220 = vmatprep.subr.mxu0 0.0
    %2221 = vmatpush1.msra.mxu0 %v2215
    %2222 = vmatprep.subr.mxu0 0.0
    %2223 = vmatpush1.msra.mxu0 %v2214
    %2224 = vmatprep.subr.mxu0 0.0
    %2225 = vmatpush1.msra.mxu0 %v2213
    %2226 = vmatprep.subr.mxu0 0.0
    %2227 = vmatpush1.msra.mxu0 %v2212
    %2228 = vmatprep.subr.mxu0 0.0
    %2229 = vmatpush1.msra.mxu0 %v2211
    %2230 = vmatprep.subr.mxu0 0.0
    %2231 = vmatpush1.msra.mxu0 %v2210
    %2232 = vmatprep.subr.mxu0 0.0
    %2233 = vmatpush1.msra.mxu0 %v2209
    %2234 = vmatprep.subr.mxu0 0.0
    %2235 = vmatpush1.msra.mxu0 %v2208
    %2236 = vmatprep.subr.mxu0 0.0
    %2237 = vmatpush1.msra.mxu0 %v2207
    %2238 = vmatprep.subr.mxu0 0.0
    %2239 = vmatpush1.msra.mxu0 %v2206
    %2240 = vmatprep.subr.mxu0 0.0
    %2241 = vmatpush1.msra.mxu0 %v2205
    %2242 = vmatprep.subr.mxu0 0.0
    %2243 = vmatpush1.msra.mxu0 %v2204
    %2244 = vmatprep.subr.mxu0 0.0
    %2245 = vmatpush1.msra.mxu0 %v2203
    %2246 = vmatprep.subr.mxu0 0.0
    %2247 = vmatpush1.msra.mxu0 %v2202
    %2248 = vmatprep.subr.mxu0 0.0
    %2249 = vmatpush1.msra.mxu0 %v2201
    %2250 = vmatprep.subr.mxu0 0.0
    %2251 = vmatpush2.msra.mxu0 0.0
    %2252 = vmatprep.subr.mxu0 0.0
    %2253 = vmatpush2.msra.mxu0 0.0
    %2254 = vmatprep.subr.mxu0 0.0
    %2255 = vmatpush2.msra.mxu0 0.0
    %2256 = vmatprep.subr.mxu0 0.0
    %2257 = vmatpush2.msra.mxu0 0.0
    %2258 = vmatprep.subr.mxu0 0.0
    %2259 = vmatpush2.msra.mxu0 0.0
    %2260 = vmatprep.subr.mxu0 0.0
    %2261 = vmatpush2.msra.mxu0 0.0
    %2262 = vmatprep.subr.mxu0 0.0
    %2263 = vmatpush2.msra.mxu0 0.0
    %2264 = vmatprep.subr.mxu0 0.0
    %2265 = vmatpush2.msra.mxu0 0.0
    %2266 = vmatprep.subr.mxu0 0.0
    %2267 = vmatpush2.msra.mxu0 0.0
    %2268 = vmatprep.subr.mxu0 0.0
    %2269 = vmatpush2.msra.mxu0 0.0
    %2270 = vmatprep.subr.mxu0 0.0
    %2271 = vmatpush2.msra.mxu0 0.0
    %2272 = vmatprep.subr.mxu0 0.0
    %2273 = vmatpush2.msra.mxu0 0.0
    %2274 = vmatprep.subr.mxu0 0.0
    %2275 = vmatpush2.msra.mxu0 0.0
    %2276 = vmatprep.subr.mxu0 0.0
    %2277 = vmatpush2.msra.mxu0 0.0
    %2278 = vmatprep.subr.mxu0 0.0
    %2279 = vmatpush2.msra.mxu0 0.0
    %2280 = vmatprep.subr.mxu0 0.0
    %2281 = vmatpush2.msra.mxu0 0.0
    %2282 = vmatprep.mubr.f32.mxu0 0.0
    %2283 = vmatmul.mubr.f32.gmra.mxu0 %v2200
    %v2284 = vpop.f32.mrf.mxu0
    %v2285 = vadd.f32 %v2217, %v2284
    %v2286 = vpop.f32.mrf.mxu0
    %2287 = vdwg.mxu0
    %v2288 = vmax.f32 %v2285, 0.0
    %v2289 = vld [vmem:[#allocation7 + $0x220] sm:$0xff]
    %v2290 = vld [vmem:[#allocation7 + $0x228] sm:$0xff]
    %v2291 = vld [vmem:[#allocation7 + $0x230] sm:$0xff]
    %v2292 = vld [vmem:[#allocation7 + $0x238] sm:$0xff]
    %v2293 = vld [vmem:[#allocation7 + $0x240] sm:$0xff]
    %v2294 = vld [vmem:[#allocation7 + $0x248] sm:$0xff]
    %v2295 = vld [vmem:[#allocation7 + $0x250] sm:$0xff]
    %v2296 = vld [vmem:[#allocation7 + $0x258] sm:$0xff]
    %v2297 = vld [vmem:[#allocation7 + $0x260] sm:$0x1]
    %vm2298 = vcmask 523264
    %v2300 = vsel %vm2298, %v2288, 0
    %2302 = vmatprep.subr.mxu0 0.0
    %2303 = vmatpush1.msra.mxu0 0.0
    %2304 = vmatprep.subr.mxu0 0.0
    %2305 = vmatpush1.msra.mxu0 0.0
    %2306 = vmatprep.subr.mxu0 0.0
    %2307 = vmatpush1.msra.mxu0 0.0
    %2308 = vmatprep.subr.mxu0 0.0
    %2309 = vmatpush1.msra.mxu0 0.0
    %2310 = vmatprep.subr.mxu0 0.0
    %2311 = vmatpush1.msra.mxu0 0.0
    %2312 = vmatprep.subr.mxu0 0.0
    %2313 = vmatpush1.msra.mxu0 0.0
    %2314 = vmatprep.subr.mxu0 0.0
    %2315 = vmatpush1.msra.mxu0 0.0
    %2316 = vmatprep.subr.mxu0 0.0
    %2317 = vmatpush1.msra.mxu0 0.0
    %2318 = vmatprep.subr.mxu0 0.0
    %2319 = vmatpush1.msra.mxu0 %v2296
    %2320 = vmatprep.subr.mxu0 0.0
    %2321 = vmatpush1.msra.mxu0 %v2295
    %2322 = vmatprep.subr.mxu0 0.0
    %2323 = vmatpush1.msra.mxu0 %v2294
    %2324 = vmatprep.subr.mxu0 0.0
    %2325 = vmatpush1.msra.mxu0 %v2293
    %2326 = vmatprep.subr.mxu0 0.0
    %2327 = vmatpush1.msra.mxu0 %v2292
    %2328 = vmatprep.subr.mxu0 0.0
    %2329 = vmatpush1.msra.mxu0 %v2291
    %2330 = vmatprep.subr.mxu0 0.0
    %2331 = vmatpush1.msra.mxu0 %v2290
    %2332 = vmatprep.subr.mxu0 0.0
    %2333 = vmatpush1.msra.mxu0 %v2289
    %2334 = vmatprep.subr.mxu0 0.0
    %2335 = vmatpush2.msra.mxu0 0.0
    %2336 = vmatprep.subr.mxu0 0.0
    %2337 = vmatpush2.msra.mxu0 0.0
    %2338 = vmatprep.subr.mxu0 0.0
    %2339 = vmatpush2.msra.mxu0 0.0
    %2340 = vmatprep.subr.mxu0 0.0
    %2341 = vmatpush2.msra.mxu0 0.0
    %2342 = vmatprep.subr.mxu0 0.0
    %2343 = vmatpush2.msra.mxu0 0.0
    %2344 = vmatprep.subr.mxu0 0.0
    %2345 = vmatpush2.msra.mxu0 0.0
    %2346 = vmatprep.subr.mxu0 0.0
    %2347 = vmatpush2.msra.mxu0 0.0
    %2348 = vmatprep.subr.mxu0 0.0
    %2349 = vmatpush2.msra.mxu0 0.0
    %2350 = vmatprep.subr.mxu0 0.0
    %2351 = vmatpush2.msra.mxu0 0.0
    %2352 = vmatprep.subr.mxu0 0.0
    %2353 = vmatpush2.msra.mxu0 0.0
    %2354 = vmatprep.subr.mxu0 0.0
    %2355 = vmatpush2.msra.mxu0 0.0
    %2356 = vmatprep.subr.mxu0 0.0
    %2357 = vmatpush2.msra.mxu0 0.0
    %2358 = vmatprep.subr.mxu0 0.0
    %2359 = vmatpush2.msra.mxu0 0.0
    %2360 = vmatprep.subr.mxu0 0.0
    %2361 = vmatpush2.msra.mxu0 0.0
    %2362 = vmatprep.subr.mxu0 0.0
    %2363 = vmatpush2.msra.mxu0 0.0
    %2364 = vmatprep.subr.mxu0 0.0
    %2365 = vmatpush2.msra.mxu0 0.0
    %2366 = vmatprep.mubr.f32.mxu0 0.0
    %2367 = vmatmul.mubr.f32.gmra.mxu0 %v2300
    %v2368 = vpop.f32.mrf.mxu0
    %v2369 = vadd.f32 %v2297, %v2368
    %v2370 = vpop.f32.mrf.mxu0
    %2371 = vdwg.mxu0
    %v2372 = vmax.f32 %v2369, 0.0
    %v2373 = vld [vmem:[#allocation7 + $0x268] sm:$0x1]
    %v2374 = vmul.f32 %v2372, %v2373
    %vm2375 = vcmask 253952
    %v2376 = vsel %vm2375, %v2374, 0.0
    %2377 = vadd.xlane.f32.xlu0 %v2376
    %v2378 = vpop.xlane.xlu0 %2377
    %v2379 = vld [vmem:[#allocation7 + $0x270] sm:$0x1]
    %v2380 = vadd.f32 %v2378, %v2379
    %v2381 = vmax.f32 %v2380, 0.0
    %vm2382 = vcmask 0
    %2383 = vst.msk [vmem:[#allocation9] sm:$0x1] %vm2382, %v2381
    // Predicated region
    $region26: #{forward.1} parent=1 // pred_check
      _
    $region27: #{forward.1} parent=1 // pred_check_branch
      %2385 = sbr.rel (0) target = $region29
    $region28: #{forward.1} parent=1 // pred_region
      %s2387 = ssub.s32 16, 16
      %2388 = vsyncadd [#allocation6], %s2387
      %s2390 = sshll.u32 [#allocation9], 4
      %s2391 = int_to_ptr.vmem [resolvable:$true] %s2390
      %2393 = dma.vmem_to_hbm [thread:$0]  %s2391, 16, %s4, [#allocation6]
    $region29: #{forward.1} parent=1 // pred_fallthru
      _
    // Predicated region
    $region30: #{forward.1} parent=1 // pred_check
      _
    $region31: #{forward.1} parent=1 // pred_check_branch
      %2395 = sbr.rel (0) target = $region33
    $region32: #{forward.1} parent=1 // pred_region
      %2396 = dma.done [#allocation6], 16
    $region33: #{forward.1} parent=1 // pred_fallthru
      _
    %2397 = vsyncpa [#allocation5], 1
    %2398 = vsyncpa [#allocation8], 1
    %2399 = vsyncpa [#allocation6], 1

</llo_original>
